<compile_context>
chip_gen: v6e
topology: v6e:2x2x1
jax: 0.10.0
libtpu: 0.0.40
codegen_flags: <defaults>
</compile_context>

<pallas_src>
import functools

import jax
import jax.numpy as jnp
from jax.experimental import pallas as pl
from jax.experimental.pallas import tpu as pltpu


def _rezero_ff_kernel(x_ref, w1_ref, b1_ref, w2_ref, b2_ref, g_ref,
                      o_ref, acc_ref, *, approximate_gelu):
    """Grid = (row_tiles, h_tiles). Accumulate over H; finalize with * g."""
    h_idx = pl.program_id(1)

    # Init accumulator with the output bias so the epilogue is just the gate.
    @pl.when(h_idx == 0)
    def _():
        acc_ref[...] = jnp.broadcast_to(
            b2_ref[...].astype(jnp.float32), acc_ref.shape)

    # First linear on this H slice: bf16 operands, f32 accumulation on MXU.
    hblk = jnp.dot(x_ref[...], w1_ref[...],
                   preferred_element_type=jnp.float32)
    hblk = hblk + b1_ref[...].astype(jnp.float32)           # (TM, TH) + (1, TH)
    hblk = jax.nn.gelu(hblk, approximate=approximate_gelu)  # f32 VPU/EUP math

    # Second linear: partial sum over this H slice into the f32 accumulator.
    acc_ref[...] += jnp.dot(hblk.astype(w2_ref.dtype), w2_ref[...],
                            preferred_element_type=jnp.float32)

    @pl.when(h_idx == pl.num_programs(1) - 1)
    def _():
        # ReZero gate: fn(x) * g
        o_ref[...] = (acc_ref[...] * g_ref[0]).astype(o_ref.dtype)


def _round_tm(t):
    """MXU / sublane friendly row-tile rounding (also bf16 packing safe)."""
    if t >= 256:
        return (t // 256) * 256
    if t >= 128:
        return 128
    return max(16, (t // 16) * 16)


def _largest_valid_th(H, cap):
    """Largest divisor of H that is a multiple of 128 and <= cap."""
    best = 128
    d = 128
    while d <= min(H, cap):
        if H % d == 0:
            best = d
        d += 128
    return best


def _footprint_bytes(tm, th, D, xb, wb, ob):
    """Double-buffered pipeline tiles + the f32 accumulator scratch."""
    dbl = 2 * (tm * D * xb        # x tile
               + D * th * wb      # W1 column slice
               + th * 4           # b1 slice (f32)
               + th * D * wb      # W2 row slice
               + D * 4            # b2 (f32)
               + tm * D * ob)     # out tile
    return dbl + tm * D * 4       # f32 accumulator


def rezero_feedforward(x, w1, b1, w2, b2, g, *, tm=512, th=1024,
                       compute_dtype=jnp.bfloat16, approximate_gelu=False):
    """ReZero(FeedForward)(x) == (gelu(x @ W1 + b1) @ W2 + b2) * g.

    x : (B, S, D);  w1: (D, H), b1: (H,), w2: (H, D), b2: (D,), g: scalar.
    Matmuls run with `compute_dtype` operands and f32 accumulation.
    """
    B, S, D = x.shape
    H = w1.shape[1]
    M = B * S

    # Lane-dense layout: last dims must be 128-multiples for unmasked stores.
    assert D % 128 == 0, "pad D to a multiple of 128 in the caller"
    assert H % 128 == 0, "pad H to a multiple of 128 in the caller"

    xb = jnp.dtype(compute_dtype).itemsize      # matmul operand bytes
    wb = xb
    ob = jnp.dtype(x.dtype).itemsize            # output bytes

    # ---- row tile: clamp to M, keep >=2 tiles for v7x megacore, round. ----
    tm = min(tm, M)
    if M >= 256 and tm > M // 2:                # shard the parallel axis
        tm = M // 2
    tm = _round_tm(tm)

    # ---- VMEM budget from the real per-TensorCore capacity. ----
    try:
        phys_vmem = int(pltpu.get_tpu_info().vmem_capacity_bytes)
    except Exception:
        phys_vmem = 64 * 1024 * 1024            # conservative (v7x per-TC)
    budget = phys_vmem - (8 << 20)

    # ---- hidden tile: prefer fully VMEM-resident weights when they fit. ----
    if _footprint_bytes(tm, H, D, xb, wb, ob) <= budget:
        th = H
    else:
        th = _largest_valid_th(H, min(th, H))
        while th > 128 and _footprint_bytes(tm, th, D, xb, wb, ob) > budget:
            th = _largest_valid_th(H, th - 128)
        while tm > 128 and _footprint_bytes(tm, th, D, xb, wb, ob) > budget:
            tm = _round_tm(max(128, tm // 2))
    n_h = H // th

    n_row = -(-M // tm)
    Mp = n_row * tm

    # ---- operand prep (cast matmul operands to compute_dtype). ----
    x2d = x.reshape(M, D)
    if Mp != M:
        x2d = jnp.pad(x2d, ((0, Mp - M), (0, 0)))
    x2d = x2d.astype(compute_dtype)
    w1c = w1.astype(compute_dtype)
    w2c = w2.astype(compute_dtype)
    b1_2d = b1.reshape(1, H).astype(jnp.float32)
    b2_2d = b2.reshape(1, D).astype(jnp.float32)
    g_arr = jnp.asarray(g, dtype=jnp.float32).reshape(1)

    footprint = _footprint_bytes(tm, th, D, xb, wb, ob)
    vmem_limit = int(min(phys_vmem - (2 << 20),
                         max(footprint + (2 << 20), 16 << 20)))

    weight_passes = 1 if n_h == 1 else n_row    # constant index => single DMA
    cost = pl.CostEstimate(
        flops=4 * Mp * D * H,                                   # two matmuls
        transcendentals=Mp * H,                                 # GELU
        bytes_accessed=(Mp * D * (xb + ob)
                        + weight_passes * 2 * D * H * wb
                        + weight_passes * (H + D) * 4),
    )

    kernel = functools.partial(_rezero_ff_kernel,
                               approximate_gelu=approximate_gelu)

    out2d = pl.pallas_call(
        kernel,
        out_shape=jax.ShapeDtypeStruct((Mp, D), x.dtype),
        grid_spec=pltpu.PrefetchScalarGridSpec(
            num_scalar_prefetch=0,
            grid=(n_row, n_h),
            in_specs=[
                pl.BlockSpec((tm, D), lambda i, h: (i, 0)),   # x rows
                pl.BlockSpec((D, th), lambda i, h: (0, h)),   # W1 column slice
                pl.BlockSpec((1, th), lambda i, h: (0, h)),   # b1 slice
                pl.BlockSpec((th, D), lambda i, h: (h, 0)),   # W2 row slice
                pl.BlockSpec((1, D), lambda i, h: (0, 0)),    # b2
                pl.BlockSpec(memory_space=pltpu.MemorySpace.SMEM),  # g scalar
            ],
            out_specs=pl.BlockSpec((tm, D), lambda i, h: (i, 0)),
            scratch_shapes=[pltpu.VMEM((tm, D), jnp.float32)],
        ),
        compiler_params=pltpu.CompilerParams(
            dimension_semantics=("parallel", "arbitrary"),
            vmem_limit_bytes=vmem_limit),
        cost_estimate=cost,
    )(x2d, w1c, b1_2d, w2c, b2_2d, g_arr)

    if Mp != M:
        out2d = out2d[:M]
    return out2d.reshape(B, S, D)


def _reference(x, w1, b1, w2, b2, g, *, approximate_gelu=False):
    """Pure-JAX (f32) mirror of ReZero(FeedForward).forward."""
    h = jax.nn.gelu(x @ w1 + b1, approximate=approximate_gelu)
    return (h @ w2 + b2) * g


if __name__ == "__main__":
    key = jax.random.PRNGKey(0)
    k_x, k_w1, k_b1, k_w2, k_b2 = jax.random.split(key, 5)

    # Small but lane-aligned shapes (D, H multiples of 128).
    B, S, D = 2, 128, 128
    H = 4 * D                      # FeedForward(dim, mult=4)
    g = jnp.float32(0.001)         # ReZero gate at its init value

    x = jax.random.normal(k_x, (B, S, D), dtype=jnp.float32)
    w1 = jax.random.normal(k_w1, (D, H), dtype=jnp.float32) * (D ** -0.5)
    b1 = jax.random.normal(k_b1, (H,), dtype=jnp.float32) * 0.02
    w2 = jax.random.normal(k_w2, (H, D), dtype=jnp.float32) * (H ** -0.5)
    b2 = jax.random.normal(k_b2, (D,), dtype=jnp.float32) * 0.02

    # At D=128 the perf review recommends tanh-GELU (VPU/EUP-bound regime).
    # TODO(synk): set approximate_gelu=False for exact torch.nn.GELU parity at large D.
    run = jax.jit(functools.partial(rezero_feedforward, tm=512, th=512,
                                    compute_dtype=jnp.bfloat16,
                                    approximate_gelu=True))
    out = jax.block_until_ready(run(x, w1, b1, w2, b2, g))
    ref = _reference(x, w1, b1, w2, b2, g, approximate_gelu=True)

    assert out.shape == (B, S, D)
    rel_err = float(jnp.max(jnp.abs(out - ref)) /
                    (jnp.max(jnp.abs(ref)) + 1e-12))
    assert rel_err < 2e-2, f"mismatch vs reference: rel_err={rel_err}"

    print("KERNEL_OK")
</pallas_src>

<mosaic_0001>
module attributes {stable_mosaic.version = 11 : i64} {
  func.func @_rezero_ff_kernel(%arg0: i32, %arg1: i32, %arg2: memref<128x128xbf16, #tpu.memory_space<vmem>>, %arg3: memref<128x512xbf16, #tpu.memory_space<vmem>>, %arg4: memref<1x512xf32, #tpu.memory_space<vmem>>, %arg5: memref<512x128xbf16, #tpu.memory_space<vmem>>, %arg6: memref<1x128xf32, #tpu.memory_space<vmem>>, %arg7: memref<1xf32, #tpu.memory_space<smem>>, %arg8: memref<128x128xf32, #tpu.memory_space<vmem>>, %arg9: memref<128x128xf32, #tpu.memory_space<vmem>>) attributes {dimension_semantics = [#tpu.dimension_semantics<parallel>, #tpu.dimension_semantics<arbitrary>], iteration_bounds = array<i64: 2, 1>, scalar_prefetch = 0 : i64, scratch_operands = 1 : i64, tpu.core_type = #tpu.core_type<tc>, window_params = [{transform_indices = @transform_0, window_bounds = array<i64: 128, 128>}, {transform_indices = @transform_1, window_bounds = array<i64: 128, 512>}, {transform_indices = @transform_2, window_bounds = array<i64: 1, 512>}, {transform_indices = @transform_3, window_bounds = array<i64: 512, 128>}, {pipeline_mode = #tpu.pipeline_mode<synchronous>, transform_indices = @transform_4, window_bounds = array<i64: 1, 128>}, {transform_indices = @transform_5, window_bounds = array<i64: 1>}, {transform_indices = @transform_6, window_bounds = array<i64: 128, 128>}]} {
    %c0_i32 = arith.constant 0 : i32
    %0 = arith.cmpi eq, %arg1, %c0_i32 : i32
    %1 = arith.extui %0 : i1 to i32
    %c0_i32_0 = arith.constant 0 : i32
    %2 = arith.cmpi ne, %1, %c0_i32_0 : i32
    scf.if %2 {
      %c0_19 = arith.constant 0 : index
      %c0_20 = arith.constant 0 : index
      %31 = vector.load %arg6[%c0_19, %c0_20] : memref<1x128xf32, #tpu.memory_space<vmem>>, vector<1x128xf32>
      %32 = vector.shape_cast %31 : vector<1x128xf32> to vector<1x128xf32>
      %33 = vector.broadcast %32 : vector<1x128xf32> to vector<128x128xf32>
      %c0_21 = arith.constant 0 : index
      %c0_22 = arith.constant 0 : index
      %34 = vector.load %arg9[%c0_21, %c0_22] : memref<128x128xf32, #tpu.memory_space<vmem>>, vector<128x128xf32>
      tpu.vector_store %arg9[%c0_21, %c0_22], %33 {strides = array<i32>} : memref<128x128xf32, #tpu.memory_space<vmem>>, vector<128x128xf32>,
    } else {
    }
    %c0 = arith.constant 0 : index
    %c0_1 = arith.constant 0 : index
    %3 = vector.load %arg2[%c0, %c0_1] : memref<128x128xbf16, #tpu.memory_space<vmem>>, vector<128x128xbf16>
    %c0_2 = arith.constant 0 : index
    %c0_3 = arith.constant 0 : index
    %4 = vector.load %arg3[%c0_2, %c0_3] : memref<128x512xbf16, #tpu.memory_space<vmem>>, vector<128x512xbf16>
    %cst = arith.constant dense<0.000000e+00> : vector<128x512xf32>
    %5 = tpu.matmul %3, %4, %cst {dimension_numbers = #tpu.dot_dimension_numbers<[1], [0], [0], [1], [0, 0, 1, 1], [], []>} : vector<128x128xbf16>, vector<128x512xbf16>, vector<128x512xf32> -> vector<128x512xf32>
    %c0_4 = arith.constant 0 : index
    %c0_5 = arith.constant 0 : index
    %6 = vector.load %arg4[%c0_4, %c0_5] : memref<1x512xf32, #tpu.memory_space<vmem>>, vector<1x512xf32>
    %7 = vector.broadcast %6 : vector<1x512xf32> to vector<128x512xf32>
    %8 = arith.addf %5, %7 : vector<128x512xf32>
    %9 = arith.mulf %8, %8 : vector<128x512xf32>
    %10 = arith.mulf %8, %9 : vector<128x512xf32>
    %cst_6 = arith.constant 4.471500e-02 : f32
    %11 = vector.broadcast %cst_6 : f32 to vector<128x512xf32>
    %12 = arith.mulf %11, %10 : vector<128x512xf32>
    %13 = arith.addf %8, %12 : vector<128x512xf32>
    %cst_7 = arith.constant 0.797884583 : f32
    %14 = vector.broadcast %cst_7 : f32 to vector<128x512xf32>
    %15 = arith.mulf %14, %13 : vector<128x512xf32>
    %16 = math.tanh %15 : vector<128x512xf32>
    %cst_8 = arith.constant 1.000000e+00 : f32
    %17 = vector.broadcast %cst_8 : f32 to vector<128x512xf32>
    %18 = arith.addf %17, %16 : vector<128x512xf32>
    %cst_9 = arith.constant 5.000000e-01 : f32
    %19 = vector.broadcast %cst_9 : f32 to vector<128x512xf32>
    %20 = arith.mulf %19, %18 : vector<128x512xf32>
    %21 = arith.mulf %8, %20 : vector<128x512xf32>
    %c0_10 = arith.constant 0 : index
    %c0_11 = arith.constant 0 : index
    %22 = vector.load %arg9[%c0_10, %c0_11] : memref<128x128xf32, #tpu.memory_space<vmem>>, vector<128x128xf32>
    %23 = arith.truncf %21 : vector<128x512xf32> to vector<128x512xbf16>
    %c0_12 = arith.constant 0 : index
    %c0_13 = arith.constant 0 : index
    %24 = vector.load %arg5[%c0_12, %c0_13] : memref<512x128xbf16, #tpu.memory_space<vmem>>, vector<512x128xbf16>
    %cst_14 = arith.constant dense<0.000000e+00> : vector<128x128xf32>
    %25 = tpu.matmul %23, %24, %cst_14 {dimension_numbers = #tpu.dot_dimension_numbers<[1], [0], [0], [1], [0, 0, 1, 1], [], []>} : vector<128x512xbf16>, vector<512x128xbf16>, vector<128x128xf32> -> vector<128x128xf32>
    %26 = arith.addf %22, %25 : vector<128x128xf32>
    %c0_15 = arith.constant 0 : index
    %c0_16 = arith.constant 0 : index
    %27 = vector.load %arg9[%c0_15, %c0_16] : memref<128x128xf32, #tpu.memory_space<vmem>>, vector<128x128xf32>
    tpu.vector_store %arg9[%c0_15, %c0_16], %26 {strides = array<i32>} : memref<128x128xf32, #tpu.memory_space<vmem>>, vector<128x128xf32>,
    %c0_i32_17 = arith.constant 0 : i32
    %28 = arith.cmpi eq, %arg1, %c0_i32_17 : i32
    %29 = arith.extui %28 : i1 to i32
    %c0_i32_18 = arith.constant 0 : i32
    %30 = arith.cmpi ne, %29, %c0_i32_18 : i32
    scf.if %30 {
      %c0_19 = arith.constant 0 : index
      %c0_20 = arith.constant 0 : index
      %31 = vector.load %arg9[%c0_19, %c0_20] : memref<128x128xf32, #tpu.memory_space<vmem>>, vector<128x128xf32>
      %c0_21 = arith.constant 0 : index
      %32 = memref.load %arg7[%c0_21] : memref<1xf32, #tpu.memory_space<smem>>
      %33 = vector.broadcast %32 : f32 to vector<128x128xf32>
      %34 = arith.mulf %31, %33 : vector<128x128xf32>
      %c0_22 = arith.constant 0 : index
      %c0_23 = arith.constant 0 : index
      %35 = vector.load %arg8[%c0_22, %c0_23] : memref<128x128xf32, #tpu.memory_space<vmem>>, vector<128x128xf32>
      tpu.vector_store %arg8[%c0_22, %c0_23], %34 {strides = array<i32>} : memref<128x128xf32, #tpu.memory_space<vmem>>, vector<128x128xf32>,
    } else {
    }
    return
  }
  func.func @transform_0(%arg0: i32, %arg1: i32) -> (i32, i32) {
    %c0_i32 = arith.constant 0 : i32
    %c0_i32_0 = arith.constant 0 : i32
    return %arg0, %c0_i32 : i32, i32
  }
  func.func @transform_1(%arg0: i32, %arg1: i32) -> (i32, i32) {
    %c0_i32 = arith.constant 0 : i32
    %c0_i32_0 = arith.constant 0 : i32
    return %c0_i32, %arg1 : i32, i32
  }
  func.func @transform_2(%arg0: i32, %arg1: i32) -> (i32, i32) {
    %c0_i32 = arith.constant 0 : i32
    %c0_i32_0 = arith.constant 0 : i32
    return %c0_i32, %arg1 : i32, i32
  }
  func.func @transform_3(%arg0: i32, %arg1: i32) -> (i32, i32) {
    %c0_i32 = arith.constant 0 : i32
    %c0_i32_0 = arith.constant 0 : i32
    return %arg1, %c0_i32 : i32, i32
  }
  func.func @transform_4(%arg0: i32, %arg1: i32) -> (i32, i32) {
    %c0_i32 = arith.constant 0 : i32
    %c0_i32_0 = arith.constant 0 : i32
    %c0_i32_1 = arith.constant 0 : i32
    return %c0_i32, %c0_i32_0 : i32, i32
  }
  func.func @transform_5(%arg0: i32, %arg1: i32) -> i32 {
    %c0_i32 = arith.constant 0 : i32
    %c0_i32_0 = arith.constant 0 : i32
    return %c0_i32 : i32
  }
  func.func @transform_6(%arg0: i32, %arg1: i32) -> (i32, i32) {
    %c0_i32 = arith.constant 0 : i32
    %c0_i32_0 = arith.constant 0 : i32
    return %arg0, %c0_i32 : i32, i32
  }
}

</mosaic_0001>

<llo_original>
// kernel: rezero_feedforward.1
$region0: #{rezero_feedforward.1}
  #allocation0 [shape = 'u32[]', space=smem, size = 0x4, offset = 0x4, fixed_abs, tag = 'smem constant byte address 0x4 - core index']
  #allocation1 [shape = 'u32[144,128]{1,0:T(1,128)}', space=vmem, size = 0x12000, scoped, tag = 'internal scratch']
  #allocation2 [shape = 'f32[128,128]{1,0:T(8,128)}', space=vmem, size = 0x10000, scoped, tag = 'scratch operand']
  #allocation3 [shape = 'f32[1]{0:T(128)S(6)}', space=smem, size = 0x200, scoped, tag = 'scoped memory for rezero_feedforward.1']
  %s0 = inlined_call_operand.vmem [shape: bf16[256,128], index: 0, kind: input, shape index: {}]
  %s1 = inlined_call_operand.vmem [shape: bf16[128,512], index: 1, kind: input, shape index: {}]
  %s2 = inlined_call_operand.vmem [shape: f32[1,512], index: 2, kind: input, shape index: {}]
  %s3 = inlined_call_operand.vmem [shape: bf16[512,128], index: 3, kind: input, shape index: {}]
  %s4 = inlined_call_operand.vmem [shape: f32[1,128], index: 4, kind: input, shape index: {}]
  %s5 = inlined_call_operand.<no memory space> [shape: f32[1], index: 5, kind: input, shape index: {}]
  %s6 = inlined_call_operand.hbm [shape: f32[256,128], index: 6, kind: output, shape index: {}]
  %s7 = sld [smem:[#allocation0]]
  $region65: #{rezero_feedforward.1} parent=0
    _
  %s9 = ssub.s32 1, %s7
  %s10 = scalar_select 0, %s9, %s7
  %11 = sst [smem:[#allocation3]] %s5
  $region1: #{rezero_feedforward.1} parent=0
    #allocation4 [shape = 'u8[131072]{0}', space=vmem, size = 0x20000, scoped, tag = 'output window, operand 0']
    #allocation5 [shape = 's32[2]{0}', space=sflag, size = 0x8, scoped, tag = 'scoped memory for rezero_feedforward.1']
    %12 = vsyncpa [#allocation5], 0
    %s13 = scalar_lea.sflag [#allocation5], 1
    %14 = vsyncpa %s13, 0
    loop: start=0, step=1, limit=4
    $region2: #{rezero_feedforward.1} parent=1 // loop_pre_header
      _
    $region3: #{rezero_feedforward.1} parent=1 // loop_header
      %s16 = sphi 0, %s20
      %p17 = scmp.ge.s32.totalorder %s16, 4
      %s23 = sphi 0, %s35
      %s24 = sphi 0, %s31
      %s25 = sphi 0, %s23
      %s26 = sphi 0, %s24
      %s27 = sphi 0, %s25
      %s28 = sphi 0, %s26
      %s38 = sphi 0, %s40
      %s41 = sphi 0, %s38
      %s42 = sphi 0, %s41
      %s58 = sphi 0, %s42
      %s64 = sphi 0, %s66
      %s67 = sphi 0, %s64
      %s68 = sphi 0, %s67
      %s84 = sphi 0, %s68
      %s90 = sphi 0, %s92
      %s93 = sphi 0, %s90
      %s94 = sphi 0, %s93
      %s110 = sphi 0, %s94
      %s116 = sphi 0, %s118
      %s119 = sphi 0, %s116
      %s120 = sphi 0, %s119
      %s136 = sphi 0, %s120
      %s140 = sphi 0, %s140
      %s142 = sphi 0, %s140
      %s143 = sphi 0, %s142
      %s157 = sphi 0, %s143
      %s161 = sphi 0, %s161
      %s163 = sphi 0, %s161
      %s164 = sphi 0, %s163
      %s178 = sphi 0, %s164
      %s184 = sphi 0, %s186
      %s187 = sphi 0, %s184
      %s188 = sphi 0, %s187
      %s204 = sphi 0, %s188
    $region4: #{rezero_feedforward.1} parent=1 // loop_header_branch
      %19 = sbr.rel (%p17) target = $region8
    $region5: #{rezero_feedforward.1} parent=1 // loop_body
      %s21 = ssub.s32 %s16, 1
      %s22 = ssub.s32 %s16, 2
      %s29 = sadd.s32 1, %s24
      %p30 = scmp.ge.s32.totalorder %s29, 1
      %s31 = scalar_select %p30, 0, %s29
      %s32 = sadd.s32 1, %s23
      %s33 = scalar_select %p30, %s32, %s23
      %p34 = scmp.ge.s32.totalorder %s33, 2
      %s35 = scalar_select %p34, 0, %s33
      %s36 = ssub.s32 %s23, %s35
      %p37 = scmp.eq.s32.totalorder %s36, 0
      %s39 = sadd.s32 %s38, 1
      %s40 = scalar_select %p37, %s38, %s39
      %p43 = pneg %p37
      %p44 = scmp.eq.s32.totalorder %s16, 1
      %p45 = por %p43, %p44
      %p46 = scmp.ne.s32.totalorder %s38, %s41
      %p47 = scmp.eq.s32.totalorder %s16, 0
      %p48 = por %p46, %p47
      %p49 = scmp.ne.s32.totalorder %s38, %s41
      %p50 = scmp.eq.s32.totalorder %s21, 1
      %p51 = por %p49, %p50
      %p52 = scmp.ne.s32.totalorder %s41, %s42
      %p53 = scmp.eq.s32.totalorder %s21, 0
      %p54 = por %p52, %p53
      %p55 = scmp.ne.s32.totalorder %s41, %s42
      %p56 = scmp.eq.s32.totalorder %s22, 1
      %p57 = por %p55, %p56
      %p59 = scmp.ne.s32.totalorder %s42, %s58
      %p60 = scmp.eq.s32.totalorder %s22, 0
      %p61 = por %p59, %p60
      %s62 = ssub.s32 %s24, %s31
      %p63 = scmp.eq.s32.totalorder %s62, 0
      %s65 = sadd.s32 %s64, 1
      %s66 = scalar_select %p63, %s64, %s65
      %p69 = pneg %p63
      %p70 = scmp.eq.s32.totalorder %s16, 1
      %p71 = por %p69, %p70
      %p72 = scmp.ne.s32.totalorder %s64, %s67
      %p73 = scmp.eq.s32.totalorder %s16, 0
      %p74 = por %p72, %p73
      %p75 = scmp.ne.s32.totalorder %s64, %s67
      %p76 = scmp.eq.s32.totalorder %s21, 1
      %p77 = por %p75, %p76
      %p78 = scmp.ne.s32.totalorder %s67, %s68
      %p79 = scmp.eq.s32.totalorder %s21, 0
      %p80 = por %p78, %p79
      %p81 = scmp.ne.s32.totalorder %s67, %s68
      %p82 = scmp.eq.s32.totalorder %s22, 1
      %p83 = por %p81, %p82
      %p85 = scmp.ne.s32.totalorder %s68, %s84
      %p86 = scmp.eq.s32.totalorder %s22, 0
      %p87 = por %p85, %p86
      %s88 = ssub.s32 %s24, %s31
      %p89 = scmp.eq.s32.totalorder %s88, 0
      %s91 = sadd.s32 %s90, 1
      %s92 = scalar_select %p89, %s90, %s91
      %p95 = pneg %p89
      %p96 = scmp.eq.s32.totalorder %s16, 1
      %p97 = por %p95, %p96
      %p98 = scmp.ne.s32.totalorder %s90, %s93
      %p99 = scmp.eq.s32.totalorder %s16, 0
      %p100 = por %p98, %p99
      %p101 = scmp.ne.s32.totalorder %s90, %s93
      %p102 = scmp.eq.s32.totalorder %s21, 1
      %p103 = por %p101, %p102
      %p104 = scmp.ne.s32.totalorder %s93, %s94
      %p105 = scmp.eq.s32.totalorder %s21, 0
      %p106 = por %p104, %p105
      %p107 = scmp.ne.s32.totalorder %s93, %s94
      %p108 = scmp.eq.s32.totalorder %s22, 1
      %p109 = por %p107, %p108
      %p111 = scmp.ne.s32.totalorder %s94, %s110
      %p112 = scmp.eq.s32.totalorder %s22, 0
      %p113 = por %p111, %p112
      %s114 = ssub.s32 %s24, %s31
      %p115 = scmp.eq.s32.totalorder %s114, 0
      %s117 = sadd.s32 %s116, 1
      %s118 = scalar_select %p115, %s116, %s117
      %p121 = pneg %p115
      %p122 = scmp.eq.s32.totalorder %s16, 1
      %p123 = por %p121, %p122
      %p124 = scmp.ne.s32.totalorder %s116, %s119
      %p125 = scmp.eq.s32.totalorder %s16, 0
      %p126 = por %p124, %p125
      %p127 = scmp.ne.s32.totalorder %s116, %s119
      %p128 = scmp.eq.s32.totalorder %s21, 1
      %p129 = por %p127, %p128
      %p130 = scmp.ne.s32.totalorder %s119, %s120
      %p131 = scmp.eq.s32.totalorder %s21, 0
      %p132 = por %p130, %p131
      %p133 = scmp.ne.s32.totalorder %s119, %s120
      %p134 = scmp.eq.s32.totalorder %s22, 1
      %p135 = por %p133, %p134
      %p137 = scmp.ne.s32.totalorder %s120, %s136
      %p138 = scmp.eq.s32.totalorder %s22, 0
      %p139 = por %p137, %p138
      %s141 = sadd.s32 %s140, 1
      %p144 = scmp.eq.s32.totalorder %s16, 1
      %p145 = scmp.ne.s32.totalorder %s140, %s142
      %p146 = scmp.eq.s32.totalorder %s16, 0
      %p147 = por %p145, %p146
      %p148 = scmp.ne.s32.totalorder %s140, %s142
      %p149 = scmp.eq.s32.totalorder %s21, 1
      %p150 = por %p148, %p149
      %p151 = scmp.ne.s32.totalorder %s142, %s143
      %p152 = scmp.eq.s32.totalorder %s21, 0
      %p153 = por %p151, %p152
      %p154 = scmp.ne.s32.totalorder %s142, %s143
      %p155 = scmp.eq.s32.totalorder %s22, 1
      %p156 = por %p154, %p155
      %p158 = scmp.ne.s32.totalorder %s143, %s157
      %p159 = scmp.eq.s32.totalorder %s22, 0
      %p160 = por %p158, %p159
      %s162 = sadd.s32 %s161, 1
      %p165 = scmp.eq.s32.totalorder %s16, 1
      %p166 = scmp.ne.s32.totalorder %s161, %s163
      %p167 = scmp.eq.s32.totalorder %s16, 0
      %p168 = por %p166, %p167
      %p169 = scmp.ne.s32.totalorder %s161, %s163
      %p170 = scmp.eq.s32.totalorder %s21, 1
      %p171 = por %p169, %p170
      %p172 = scmp.ne.s32.totalorder %s163, %s164
      %p173 = scmp.eq.s32.totalorder %s21, 0
      %p174 = por %p172, %p173
      %p175 = scmp.ne.s32.totalorder %s163, %s164
      %p176 = scmp.eq.s32.totalorder %s22, 1
      %p177 = por %p175, %p176
      %p179 = scmp.ne.s32.totalorder %s164, %s178
      %p180 = scmp.eq.s32.totalorder %s22, 0
      %p181 = por %p179, %p180
      %s182 = ssub.s32 %s23, %s35
      %p183 = scmp.eq.s32.totalorder %s182, 0
      %s185 = sadd.s32 %s184, 1
      %s186 = scalar_select %p183, %s184, %s185
      %p189 = pneg %p183
      %p190 = scmp.eq.s32.totalorder %s16, 1
      %p191 = por %p189, %p190
      %p192 = scmp.ne.s32.totalorder %s184, %s187
      %p193 = scmp.eq.s32.totalorder %s16, 0
      %p194 = por %p192, %p193
      %p195 = scmp.ne.s32.totalorder %s184, %s187
      %p196 = scmp.eq.s32.totalorder %s21, 1
      %p197 = por %p195, %p196
      %p198 = scmp.ne.s32.totalorder %s187, %s188
      %p199 = scmp.eq.s32.totalorder %s21, 0
      %p200 = por %p198, %p199
      %p201 = scmp.ne.s32.totalorder %s187, %s188
      %p202 = scmp.eq.s32.totalorder %s22, 1
      %p203 = por %p201, %p202
      %p205 = scmp.ne.s32.totalorder %s188, %s204
      %p206 = scmp.eq.s32.totalorder %s22, 0
      %p207 = por %p205, %p206
      %p208 = scmp.le.s32.totalorder 1, %s16
      %p209 = scmp.lt.s32.totalorder %s16, 3
      %p210 = pnand %p208, %p209
      %p211 = pneg %p210
      // Predicated region
      $region9: #{rezero_feedforward.1} parent=5 // pred_check
        _
      $region10: #{rezero_feedforward.1} parent=5 // pred_check_branch
        %213 = sbr.rel (%p210) target = $region12
      $region11: #{rezero_feedforward.1} parent=5 // pred_region
        %s214 = ssub.s32 %s16, 1
        // Predicated region
        $region13: #{rezero_feedforward.1} parent=11 // pred_check
          %p215 = pneg %p80
        $region14: #{rezero_feedforward.1} parent=11 // pred_check_branch
          %217 = sbr.rel (%p215) target = $region16
        $region15: #{rezero_feedforward.1} parent=11 // pred_region
          %s218 = smul.u32 4, %s26
          %p219 = scmp.lt.s32.totalorder %s218, 3
          %s220 = scalar_select %p219, %s218, 3
          %s221 = smul.addr %s220, 4
          %s222 = scalar_lea.vmem %s1, %s221
          %s223 = smul.u32 4, %s26
        $region16: #{rezero_feedforward.1} parent=11 // pred_fallthru
          _
        // Predicated region
        $region17: #{rezero_feedforward.1} parent=11 // pred_check
          %p224 = pneg %p106
        $region18: #{rezero_feedforward.1} parent=11 // pred_check_branch
          %226 = sbr.rel (%p224) target = $region20
        $region19: #{rezero_feedforward.1} parent=11 // pred_region
          %s227 = smul.u32 4, %s26
          %p228 = scmp.lt.s32.totalorder %s227, 3
          %s229 = scalar_select %p228, %s227, 3
          %s230 = scalar_lea.vmem %s2, %s229
          %s231 = smul.u32 4, %s26
        $region20: #{rezero_feedforward.1} parent=11 // pred_fallthru
          _
        // Predicated region
        $region21: #{rezero_feedforward.1} parent=11 // pred_check
          %p232 = pneg %p132
        $region22: #{rezero_feedforward.1} parent=11 // pred_check_branch
          %234 = sbr.rel (%p232) target = $region24
        $region23: #{rezero_feedforward.1} parent=11 // pred_region
          %s235 = smul.u32 64, %s26
          %p236 = scmp.lt.s32.totalorder %s235, 63
          %s237 = scalar_select %p236, %s235, 63
          %s238 = smul.addr %s237, 4
          %s239 = scalar_lea.vmem %s3, %s238
          %s240 = smul.u32 64, %s26
        $region24: #{rezero_feedforward.1} parent=11 // pred_fallthru
          _
        // Predicated region
        $region25: #{rezero_feedforward.1} parent=11 // pred_check
          %p241 = pneg %p153
        $region26: #{rezero_feedforward.1} parent=11 // pred_check_branch
          %243 = sbr.rel (%p241) target = $region28
        $region27: #{rezero_feedforward.1} parent=11 // pred_region
          _
        $region28: #{rezero_feedforward.1} parent=11 // pred_fallthru
          _
        // Predicated region
        $region29: #{rezero_feedforward.1} parent=11 // pred_check
          %p244 = pneg %p174
        $region30: #{rezero_feedforward.1} parent=11 // pred_check_branch
          %246 = sbr.rel (%p244) target = $region32
        $region31: #{rezero_feedforward.1} parent=11 // pred_region
          _
        $region32: #{rezero_feedforward.1} parent=11 // pred_fallthru
          _
      $region12: #{rezero_feedforward.1} parent=5 // pred_fallthru
        _
      %p247 = scmp.lt.s32.totalorder %s16, 2
      // Predicated region
      $region33: #{rezero_feedforward.1} parent=5 // pred_check
        %p248 = pneg %p247
      $region34: #{rezero_feedforward.1} parent=5 // pred_check_branch
        %250 = sbr.rel (%p248) target = $region36
      $region35: #{rezero_feedforward.1} parent=5 // pred_region
        // Predicated region
        $region37: #{rezero_feedforward.1} parent=35 // pred_check
          %p251 = pneg %p48
        $region38: #{rezero_feedforward.1} parent=35 // pred_check_branch
          %253 = sbr.rel (%p251) target = $region40
        $region39: #{rezero_feedforward.1} parent=35 // pred_region
          %s254 = smul.u32 16, %s23
          %p255 = scmp.lt.s32.totalorder %s254, 31
          %s256 = scalar_select %p255, %s254, 31
          %s257 = smul.addr %s256, 4
          %s258 = scalar_lea.vmem %s0, %s257
          %s259 = smul.u32 16, %s23
        $region40: #{rezero_feedforward.1} parent=35 // pred_fallthru
          _
      $region36: #{rezero_feedforward.1} parent=5 // pred_fallthru
        _
      %p260 = scmp.le.s32.totalorder 1, %s16
      %p261 = scmp.lt.s32.totalorder %s16, 3
      %p262 = pnand %p260, %p261
      %p263 = pneg %p262
      // Predicated region
      $region41: #{rezero_feedforward.1} parent=5 // pred_check
        _
      $region42: #{rezero_feedforward.1} parent=5 // pred_check_branch
        %265 = sbr.rel (%p262) target = $region44
      $region43: #{rezero_feedforward.1} parent=5 // pred_region
        %s266 = ssub.s32 %s16, 1
        %s267 = smul.u32 16, %s25
        %p268 = scmp.lt.s32.totalorder %s267, 31
        %s269 = scalar_select %p268, %s267, 31
        %s270 = smul.addr %s269, 4
        %s271 = scalar_lea.vmem %s0, %s270
        %p272 = pneg %p54
        %p273 = pneg %p51
        %s274 = smul.u32 4, %s26
        %p275 = scmp.lt.s32.totalorder %s274, 3
        %s276 = scalar_select %p275, %s274, 3
        %s277 = smul.addr %s276, 4
        %s278 = scalar_lea.vmem %s1, %s277
        %p279 = pneg %p80
        %p280 = pneg %p77
        %s281 = smul.u32 4, %s26
        %p282 = scmp.lt.s32.totalorder %s281, 3
        %s283 = scalar_select %p282, %s281, 3
        %s284 = scalar_lea.vmem %s2, %s283
        %p285 = pneg %p106
        %p286 = pneg %p103
        %s287 = smul.u32 64, %s26
        %p288 = scmp.lt.s32.totalorder %s287, 63
        %s289 = scalar_select %p288, %s287, 63
        %s290 = smul.addr %s289, 4
        %s291 = scalar_lea.vmem %s3, %s290
        %p292 = pneg %p132
        %p293 = pneg %p129
        %p294 = pneg %p153
        %p295 = pneg %p150
        %p296 = pneg %p174
        %p297 = pneg %p171
        %p298 = pneg %p200
        %p299 = pneg %p197
        %s300 = sand.u32 %s187, 1
        %s301 = scalar_lea.sflag [#allocation5], %s300
        %s302 = sand.u32 %s187, 1
        %s303 = smul.addr %s302, 128
        %s304 = scalar_lea.vmem [#allocation4], %s303
        %s305 = smul.u32 16, %s25
        %p306 = scmp.lt.s32.totalorder %s305, 31
        %s307 = scalar_select %p306, %s305, 31
        %s308 = smul.addr %s307, 4
        %s309 = scalar_lea.vmem %s0, %s308
        %s310 = smul.u32 16, %s25
        %s311 = smul.u32 4, %s26
        %p312 = scmp.lt.s32.totalorder %s311, 3
        %s313 = scalar_select %p312, %s311, 3
        %s314 = smul.addr %s313, 4
        %s315 = scalar_lea.vmem %s1, %s314
        %s316 = smul.u32 4, %s26
        %s317 = smul.u32 4, %s26
        %p318 = scmp.lt.s32.totalorder %s317, 3
        %s319 = scalar_select %p318, %s317, 3
        %s320 = scalar_lea.vmem %s2, %s319
        %s321 = smul.u32 4, %s26
        %s322 = smul.u32 64, %s26
        %p323 = scmp.lt.s32.totalorder %s322, 63
        %s324 = scalar_select %p323, %s322, 63
        %s325 = smul.addr %s324, 4
        %s326 = scalar_lea.vmem %s3, %s325
        %s327 = smul.u32 64, %s26
        %s328 = smul.u32 16, %s25
        %p330 = scmp.eq.s32.totalorder %s26, 0
        // Predicated region
        $region45: #{rezero_feedforward.1} parent=43 // pred_check
          %p331 = pneg %p330
        $region46: #{rezero_feedforward.1} parent=43 // pred_check_branch
          %333 = sbr.rel (%p331) target = $region48
        $region47: #{rezero_feedforward.1} parent=43 // pred_region
          %v334 = vld [vmem:[%s4] sm:$0x1]
          %v336 = vlaneseq
          %v337 = vshrl.u32 %v336, 7
          %v338 = vsub.s32 0, %v337
          %v339 = vrot.slane %v334, %v338
          %341 = vst [vmem:[#allocation2] sm:$0xff] %v339
          %342 = vst [vmem:[#allocation2 + $0x8] sm:$0xff] %v339
          %343 = vst [vmem:[#allocation2 + $0x10] sm:$0xff] %v339
          %344 = vst [vmem:[#allocation2 + $0x18] sm:$0xff] %v339
          %345 = vst [vmem:[#allocation2 + $0x20] sm:$0xff] %v339
          %346 = vst [vmem:[#allocation2 + $0x28] sm:$0xff] %v339
          %347 = vst [vmem:[#allocation2 + $0x30] sm:$0xff] %v339
          %348 = vst [vmem:[#allocation2 + $0x38] sm:$0xff] %v339
          %349 = vst [vmem:[#allocation2 + $0x40] sm:$0xff] %v339
          %350 = vst [vmem:[#allocation2 + $0x48] sm:$0xff] %v339
          %351 = vst [vmem:[#allocation2 + $0x50] sm:$0xff] %v339
          %352 = vst [vmem:[#allocation2 + $0x58] sm:$0xff] %v339
          %353 = vst [vmem:[#allocation2 + $0x60] sm:$0xff] %v339
          %354 = vst [vmem:[#allocation2 + $0x68] sm:$0xff] %v339
          %355 = vst [vmem:[#allocation2 + $0x70] sm:$0xff] %v339
          %356 = vst [vmem:[#allocation2 + $0x78] sm:$0xff] %v339
        $region48: #{rezero_feedforward.1} parent=43 // pred_fallthru
          _
        %v357 = vld [vmem:[%s309] sm:$0xf]
        %v358 = vld [vmem:[%s309 + $0x4] sm:$0xf]
        %v359 = vld [vmem:[%s309 + $0x8] sm:$0xf]
        %v360 = vld [vmem:[%s309 + $0xc] sm:$0xf]
        %v361 = vld [vmem:[%s309 + $0x10] sm:$0xf]
        %v362 = vld [vmem:[%s309 + $0x14] sm:$0xf]
        %v363 = vld [vmem:[%s309 + $0x18] sm:$0xf]
        %v364 = vld [vmem:[%s309 + $0x1c] sm:$0xf]
        %v365 = vld [vmem:[%s309 + $0x20] sm:$0xf]
        %v366 = vld [vmem:[%s309 + $0x24] sm:$0xf]
        %v367 = vld [vmem:[%s309 + $0x28] sm:$0xf]
        %v368 = vld [vmem:[%s309 + $0x2c] sm:$0xf]
        %v369 = vld [vmem:[%s309 + $0x30] sm:$0xf]
        %v370 = vld [vmem:[%s309 + $0x34] sm:$0xf]
        %v371 = vld [vmem:[%s309 + $0x38] sm:$0xf]
        %v372 = vld [vmem:[%s309 + $0x3c] sm:$0xf]
        %v373 = vld [vmem:[%s315] sm:$0xff]
        %v374 = vld [vmem:[%s315 + $0x8] sm:$0xff]
        %v375 = vld [vmem:[%s315 + $0x10] sm:$0xff]
        %v376 = vld [vmem:[%s315 + $0x18] sm:$0xff]
        %v377 = vld [vmem:[%s315 + $0x20] sm:$0xff]
        %v378 = vld [vmem:[%s315 + $0x28] sm:$0xff]
        %v379 = vld [vmem:[%s315 + $0x30] sm:$0xff]
        %v380 = vld [vmem:[%s315 + $0x38] sm:$0xff]
        %v381 = vld [vmem:[%s315 + $0x40] sm:$0xff]
        %v382 = vld [vmem:[%s315 + $0x48] sm:$0xff]
        %v383 = vld [vmem:[%s315 + $0x50] sm:$0xff]
        %v384 = vld [vmem:[%s315 + $0x58] sm:$0xff]
        %v385 = vld [vmem:[%s315 + $0x60] sm:$0xff]
        %v386 = vld [vmem:[%s315 + $0x68] sm:$0xff]
        %v387 = vld [vmem:[%s315 + $0x70] sm:$0xff]
        %v388 = vld [vmem:[%s315 + $0x78] sm:$0xff]
        %v389 = vld [vmem:[%s315 + $0x80] sm:$0xff]
        %v390 = vld [vmem:[%s315 + $0x88] sm:$0xff]
        %v391 = vld [vmem:[%s315 + $0x90] sm:$0xff]
        %v392 = vld [vmem:[%s315 + $0x98] sm:$0xff]
        %v393 = vld [vmem:[%s315 + $0xa0] sm:$0xff]
        %v394 = vld [vmem:[%s315 + $0xa8] sm:$0xff]
        %v395 = vld [vmem:[%s315 + $0xb0] sm:$0xff]
        %v396 = vld [vmem:[%s315 + $0xb8] sm:$0xff]
        %v397 = vld [vmem:[%s315 + $0xc0] sm:$0xff]
        %v398 = vld [vmem:[%s315 + $0xc8] sm:$0xff]
        %v399 = vld [vmem:[%s315 + $0xd0] sm:$0xff]
        %v400 = vld [vmem:[%s315 + $0xd8] sm:$0xff]
        %v401 = vld [vmem:[%s315 + $0xe0] sm:$0xff]
        %v402 = vld [vmem:[%s315 + $0xe8] sm:$0xff]
        %v403 = vld [vmem:[%s315 + $0xf0] sm:$0xff]
        %v404 = vld [vmem:[%s315 + $0xf8] sm:$0xff]
        %v405 = vld [vmem:[%s320] sm:$0xf]
        %v407 = vlaneseq
        %v408 = vshrl.u32 %v407, 7
        %v409 = vsub.s32 0, %v408
        %v410 = vrot.slane %v405, %v409
        %v411 = vlaneseq
        %v412 = vshrl.u32 %v411, 7
        %v413 = vsub.s32 1, %v412
        %v414 = vrot.slane %v405, %v413
        %v415 = vlaneseq
        %v416 = vshrl.u32 %v415, 7
        %v417 = vsub.s32 2, %v416
        %v418 = vrot.slane %v405, %v417
        %v419 = vlaneseq
        %v420 = vshrl.u32 %v419, 7
        %v421 = vsub.s32 3, %v420
        %v422 = vrot.slane %v405, %v421
        %v443 = vunpack.c.l.b16 %v357
        %v444 = vunpack.c.l.b16 %v358
        %v445 = vunpack.c.l.b16 %v359
        %v446 = vunpack.c.l.b16 %v360
        %v447 = vunpack.c.l.b16 %v361
        %v448 = vunpack.c.l.b16 %v362
        %v449 = vunpack.c.l.b16 %v363
        %v450 = vunpack.c.l.b16 %v364
        %v451 = vunpack.c.l.b16 %v365
        %v452 = vunpack.c.l.b16 %v366
        %v453 = vunpack.c.l.b16 %v367
        %v454 = vunpack.c.l.b16 %v368
        %v455 = vunpack.c.l.b16 %v369
        %v456 = vunpack.c.l.b16 %v370
        %v457 = vunpack.c.l.b16 %v371
        %v458 = vunpack.c.l.b16 %v372
        %v459 = vpack.c.b16 %v444, %v443
        %v460 = vpack.c.b16 %v446, %v445
        %v461 = vpack.c.b16 %v448, %v447
        %v462 = vpack.c.b16 %v450, %v449
        %v463 = vpack.c.b16 %v452, %v451
        %v464 = vpack.c.b16 %v454, %v453
        %v465 = vpack.c.b16 %v456, %v455
        %v466 = vpack.c.b16 %v458, %v457
        %v507 = vunpack.c.l.b16 %v373
        %v508 = vunpack.c.h.b16 %v373
        %v509 = vunpack.c.l.b16 %v374
        %v510 = vunpack.c.h.b16 %v374
        %v511 = vunpack.c.l.b16 %v375
        %v512 = vunpack.c.h.b16 %v375
        %v513 = vunpack.c.l.b16 %v376
        %v514 = vunpack.c.h.b16 %v376
        %v515 = vunpack.c.l.b16 %v377
        %v516 = vunpack.c.h.b16 %v377
        %v517 = vunpack.c.l.b16 %v378
        %v518 = vunpack.c.h.b16 %v378
        %v519 = vunpack.c.l.b16 %v379
        %v520 = vunpack.c.h.b16 %v379
        %v521 = vunpack.c.l.b16 %v380
        %v522 = vunpack.c.h.b16 %v380
        %v523 = vunpack.c.l.b16 %v381
        %v524 = vunpack.c.h.b16 %v381
        %v525 = vunpack.c.l.b16 %v382
        %v526 = vunpack.c.h.b16 %v382
        %v527 = vunpack.c.l.b16 %v383
        %v528 = vunpack.c.h.b16 %v383
        %v529 = vunpack.c.l.b16 %v384
        %v530 = vunpack.c.h.b16 %v384
        %v531 = vunpack.c.l.b16 %v385
        %v532 = vunpack.c.h.b16 %v385
        %v533 = vunpack.c.l.b16 %v386
        %v534 = vunpack.c.h.b16 %v386
        %v535 = vunpack.c.l.b16 %v387
        %v536 = vunpack.c.h.b16 %v387
        %v537 = vunpack.c.l.b16 %v388
        %v538 = vunpack.c.h.b16 %v388
        %v539 = vunpack.c.l.b16 %v389
        %v540 = vunpack.c.h.b16 %v389
        %v541 = vunpack.c.l.b16 %v390
        %v542 = vunpack.c.h.b16 %v390
        %v543 = vunpack.c.l.b16 %v391
        %v544 = vunpack.c.h.b16 %v391
        %v545 = vunpack.c.l.b16 %v392
        %v546 = vunpack.c.h.b16 %v392
        %v547 = vunpack.c.l.b16 %v393
        %v548 = vunpack.c.h.b16 %v393
        %v549 = vunpack.c.l.b16 %v394
        %v550 = vunpack.c.h.b16 %v394
        %v551 = vunpack.c.l.b16 %v395
        %v552 = vunpack.c.h.b16 %v395
        %v553 = vunpack.c.l.b16 %v396
        %v554 = vunpack.c.h.b16 %v396
        %v555 = vunpack.c.l.b16 %v397
        %v556 = vunpack.c.h.b16 %v397
        %v557 = vunpack.c.l.b16 %v398
        %v558 = vunpack.c.h.b16 %v398
        %v559 = vunpack.c.l.b16 %v399
        %v560 = vunpack.c.h.b16 %v399
        %v561 = vunpack.c.l.b16 %v400
        %v562 = vunpack.c.h.b16 %v400
        %v563 = vunpack.c.l.b16 %v401
        %v564 = vunpack.c.h.b16 %v401
        %v565 = vunpack.c.l.b16 %v402
        %v566 = vunpack.c.h.b16 %v402
        %v567 = vunpack.c.l.b16 %v403
        %v568 = vunpack.c.h.b16 %v403
        %v569 = vunpack.c.l.b16 %v404
        %v570 = vunpack.c.h.b16 %v404
        %v571 = vpack.c.b16 %v511, %v507
        %v572 = vpack.c.b16 %v512, %v508
        %v573 = vpack.c.b16 %v513, %v509
        %v574 = vpack.c.b16 %v514, %v510
        %v575 = vpack.c.b16 %v519, %v515
        %v576 = vpack.c.b16 %v520, %v516
        %v577 = vpack.c.b16 %v521, %v517
        %v578 = vpack.c.b16 %v522, %v518
        %v579 = vpack.c.b16 %v527, %v523
        %v580 = vpack.c.b16 %v528, %v524
        %v581 = vpack.c.b16 %v529, %v525
        %v582 = vpack.c.b16 %v530, %v526
        %v583 = vpack.c.b16 %v535, %v531
        %v584 = vpack.c.b16 %v536, %v532
        %v585 = vpack.c.b16 %v537, %v533
        %v586 = vpack.c.b16 %v538, %v534
        %v587 = vpack.c.b16 %v543, %v539
        %v588 = vpack.c.b16 %v544, %v540
        %v589 = vpack.c.b16 %v545, %v541
        %v590 = vpack.c.b16 %v546, %v542
        %v591 = vpack.c.b16 %v551, %v547
        %v592 = vpack.c.b16 %v552, %v548
        %v593 = vpack.c.b16 %v553, %v549
        %v594 = vpack.c.b16 %v554, %v550
        %v595 = vpack.c.b16 %v559, %v555
        %v596 = vpack.c.b16 %v560, %v556
        %v597 = vpack.c.b16 %v561, %v557
        %v598 = vpack.c.b16 %v562, %v558
        %v599 = vpack.c.b16 %v567, %v563
        %v600 = vpack.c.b16 %v568, %v564
        %v601 = vpack.c.b16 %v569, %v565
        %v602 = vpack.c.b16 %v570, %v566
        %635 = vmatprep.subr.bf16.mxu0 %v600
        %636 = vmatpush1.bf16.msra.mxu0 %v599
        %637 = vmatprep.subr.bf16.mxu0 %v596
        %638 = vmatpush1.bf16.msra.mxu0 %v595
        %639 = vmatprep.subr.bf16.mxu0 %v592
        %640 = vmatpush1.bf16.msra.mxu0 %v591
        %641 = vmatprep.subr.bf16.mxu0 %v588
        %642 = vmatpush1.bf16.msra.mxu0 %v587
        %643 = vmatprep.subr.bf16.mxu0 %v584
        %644 = vmatpush1.bf16.msra.mxu0 %v583
        %645 = vmatprep.subr.bf16.mxu0 %v580
        %646 = vmatpush1.bf16.msra.mxu0 %v579
        %647 = vmatprep.subr.bf16.mxu0 %v576
        %648 = vmatpush1.bf16.msra.mxu0 %v575
        %649 = vmatprep.subr.bf16.mxu0 %v572
        %650 = vmatpush1.bf16.msra.mxu0 %v571
        %651 = vmatprep.subr.bf16.mxu0 0
        %652 = vmatpush2.bf16.msra.mxu0 0
        %653 = vmatprep.subr.bf16.mxu0 0
        %654 = vmatpush2.bf16.msra.mxu0 0
        %655 = vmatprep.subr.bf16.mxu0 0
        %656 = vmatpush2.bf16.msra.mxu0 0
        %657 = vmatprep.subr.bf16.mxu0 0
        %658 = vmatpush2.bf16.msra.mxu0 0
        %659 = vmatprep.subr.bf16.mxu0 0
        %660 = vmatpush2.bf16.msra.mxu0 0
        %661 = vmatprep.subr.bf16.mxu0 0
        %662 = vmatpush2.bf16.msra.mxu0 0
        %663 = vmatprep.subr.bf16.mxu0 0
        %664 = vmatpush2.bf16.msra.mxu0 0
        %665 = vmatprep.subr.bf16.mxu0 0
        %666 = vmatpush2.bf16.msra.mxu0 0
        %667 = vmatprep.mubr.bf16.mxu0 0
        %668 = vmatmul.mubr.bf16.gmra.mxu0 %v459
        %v669 = vpop.f32.mrf.mxu0
        %v670 = vadd.f32 %v410, %v669
        %v671 = vpop.f32.mrf.mxu0
        %v672 = vadd.f32 %v414, %v671
        %v673 = vpop.f32.mrf.mxu0
        %v674 = vadd.f32 %v410, %v673
        %v675 = vpop.f32.mrf.mxu0
        %v676 = vadd.f32 %v414, %v675
        %677 = vmatprep.mubr.bf16.mxu0 0
        %678 = vmatmul.mubr.bf16.gmra.mxu0 %v460
        %v679 = vpop.f32.mrf.mxu0
        %v680 = vadd.f32 %v410, %v679
        %v681 = vpop.f32.mrf.mxu0
        %v682 = vadd.f32 %v414, %v681
        %v683 = vpop.f32.mrf.mxu0
        %v684 = vadd.f32 %v410, %v683
        %v685 = vpop.f32.mrf.mxu0
        %v686 = vadd.f32 %v414, %v685
        %687 = vmatprep.mubr.bf16.mxu0 0
        %688 = vmatmul.mubr.bf16.gmra.mxu0 %v461
        %v689 = vpop.f32.mrf.mxu0
        %v690 = vadd.f32 %v410, %v689
        %v691 = vpop.f32.mrf.mxu0
        %v692 = vadd.f32 %v414, %v691
        %v693 = vpop.f32.mrf.mxu0
        %v694 = vadd.f32 %v410, %v693
        %v695 = vpop.f32.mrf.mxu0
        %v696 = vadd.f32 %v414, %v695
        %697 = vmatprep.mubr.bf16.mxu0 0
        %698 = vmatmul.mubr.bf16.gmra.mxu0 %v462
        %v699 = vpop.f32.mrf.mxu0
        %v700 = vadd.f32 %v410, %v699
        %v701 = vpop.f32.mrf.mxu0
        %v702 = vadd.f32 %v414, %v701
        %v703 = vpop.f32.mrf.mxu0
        %v704 = vadd.f32 %v410, %v703
        %v705 = vpop.f32.mrf.mxu0
        %v706 = vadd.f32 %v414, %v705
        %707 = vmatprep.mubr.bf16.mxu0 0
        %708 = vmatmul.mubr.bf16.gmra.mxu0 %v463
        %v709 = vpop.f32.mrf.mxu0
        %v710 = vadd.f32 %v410, %v709
        %v711 = vpop.f32.mrf.mxu0
        %v712 = vadd.f32 %v414, %v711
        %v713 = vpop.f32.mrf.mxu0
        %v714 = vadd.f32 %v410, %v713
        %v715 = vpop.f32.mrf.mxu0
        %v716 = vadd.f32 %v414, %v715
        %717 = vmatprep.mubr.bf16.mxu0 0
        %718 = vmatmul.mubr.bf16.gmra.mxu0 %v464
        %v719 = vpop.f32.mrf.mxu0
        %v720 = vadd.f32 %v410, %v719
        %v721 = vpop.f32.mrf.mxu0
        %v722 = vadd.f32 %v414, %v721
        %v723 = vpop.f32.mrf.mxu0
        %v724 = vadd.f32 %v410, %v723
        %v725 = vpop.f32.mrf.mxu0
        %v726 = vadd.f32 %v414, %v725
        %727 = vmatprep.mubr.bf16.mxu0 0
        %728 = vmatmul.mubr.bf16.gmra.mxu0 %v465
        %v729 = vpop.f32.mrf.mxu0
        %v730 = vadd.f32 %v410, %v729
        %v731 = vpop.f32.mrf.mxu0
        %v732 = vadd.f32 %v414, %v731
        %v733 = vpop.f32.mrf.mxu0
        %v734 = vadd.f32 %v410, %v733
        %v735 = vpop.f32.mrf.mxu0
        %v736 = vadd.f32 %v414, %v735
        %737 = vmatprep.mubr.bf16.mxu0 0
        %738 = vmatmul.mubr.bf16.gmra.mxu0 %v466
        %v739 = vpop.f32.mrf.mxu0
        %v740 = vadd.f32 %v410, %v739
        %v741 = vpop.f32.mrf.mxu0
        %v742 = vadd.f32 %v414, %v741
        %v743 = vpop.f32.mrf.mxu0
        %v744 = vadd.f32 %v410, %v743
        %v745 = vpop.f32.mrf.mxu0
        %v746 = vadd.f32 %v414, %v745
        %747 = vdwg.mxu0
        %748 = vmatprep.subr.bf16.mxu0 %v602
        %749 = vmatpush1.bf16.msra.mxu0 %v601
        %750 = vmatprep.subr.bf16.mxu0 %v598
        %751 = vmatpush1.bf16.msra.mxu0 %v597
        %752 = vmatprep.subr.bf16.mxu0 %v594
        %753 = vmatpush1.bf16.msra.mxu0 %v593
        %754 = vmatprep.subr.bf16.mxu0 %v590
        %755 = vmatpush1.bf16.msra.mxu0 %v589
        %756 = vmatprep.subr.bf16.mxu0 %v586
        %757 = vmatpush1.bf16.msra.mxu0 %v585
        %758 = vmatprep.subr.bf16.mxu0 %v582
        %759 = vmatpush1.bf16.msra.mxu0 %v581
        %760 = vmatprep.subr.bf16.mxu0 %v578
        %761 = vmatpush1.bf16.msra.mxu0 %v577
        %762 = vmatprep.subr.bf16.mxu0 %v574
        %763 = vmatpush1.bf16.msra.mxu0 %v573
        %764 = vmatprep.subr.bf16.mxu0 0
        %765 = vmatpush2.bf16.msra.mxu0 0
        %766 = vmatprep.subr.bf16.mxu0 0
        %767 = vmatpush2.bf16.msra.mxu0 0
        %768 = vmatprep.subr.bf16.mxu0 0
        %769 = vmatpush2.bf16.msra.mxu0 0
        %770 = vmatprep.subr.bf16.mxu0 0
        %771 = vmatpush2.bf16.msra.mxu0 0
        %772 = vmatprep.subr.bf16.mxu0 0
        %773 = vmatpush2.bf16.msra.mxu0 0
        %774 = vmatprep.subr.bf16.mxu0 0
        %775 = vmatpush2.bf16.msra.mxu0 0
        %776 = vmatprep.subr.bf16.mxu0 0
        %777 = vmatpush2.bf16.msra.mxu0 0
        %778 = vmatprep.subr.bf16.mxu0 0
        %779 = vmatpush2.bf16.msra.mxu0 0
        %780 = vmatprep.mubr.bf16.mxu0 0
        %781 = vmatmul.mubr.bf16.gmra.mxu0 %v459
        %v782 = vpop.f32.mrf.mxu0
        %v783 = vadd.f32 %v418, %v782
        %v784 = vpop.f32.mrf.mxu0
        %v785 = vadd.f32 %v422, %v784
        %v786 = vpop.f32.mrf.mxu0
        %v787 = vadd.f32 %v418, %v786
        %v788 = vpop.f32.mrf.mxu0
        %v789 = vadd.f32 %v422, %v788
        %790 = vmatprep.mubr.bf16.mxu0 0
        %791 = vmatmul.mubr.bf16.gmra.mxu0 %v460
        %v792 = vpop.f32.mrf.mxu0
        %v793 = vadd.f32 %v418, %v792
        %v794 = vpop.f32.mrf.mxu0
        %v795 = vadd.f32 %v422, %v794
        %v796 = vpop.f32.mrf.mxu0
        %v797 = vadd.f32 %v418, %v796
        %v798 = vpop.f32.mrf.mxu0
        %v799 = vadd.f32 %v422, %v798
        %800 = vmatprep.mubr.bf16.mxu0 0
        %801 = vmatmul.mubr.bf16.gmra.mxu0 %v461
        %v802 = vpop.f32.mrf.mxu0
        %v803 = vadd.f32 %v418, %v802
        %v804 = vpop.f32.mrf.mxu0
        %v805 = vadd.f32 %v422, %v804
        %v806 = vpop.f32.mrf.mxu0
        %v807 = vadd.f32 %v418, %v806
        %v808 = vpop.f32.mrf.mxu0
        %v809 = vadd.f32 %v422, %v808
        %810 = vmatprep.mubr.bf16.mxu0 0
        %811 = vmatmul.mubr.bf16.gmra.mxu0 %v462
        %v812 = vpop.f32.mrf.mxu0
        %v813 = vadd.f32 %v418, %v812
        %v814 = vpop.f32.mrf.mxu0
        %v815 = vadd.f32 %v422, %v814
        %v816 = vpop.f32.mrf.mxu0
        %v817 = vadd.f32 %v418, %v816
        %v818 = vpop.f32.mrf.mxu0
        %v819 = vadd.f32 %v422, %v818
        %820 = vmatprep.mubr.bf16.mxu0 0
        %821 = vmatmul.mubr.bf16.gmra.mxu0 %v463
        %v822 = vpop.f32.mrf.mxu0
        %v823 = vadd.f32 %v418, %v822
        %v824 = vpop.f32.mrf.mxu0
        %v825 = vadd.f32 %v422, %v824
        %v826 = vpop.f32.mrf.mxu0
        %v827 = vadd.f32 %v418, %v826
        %v828 = vpop.f32.mrf.mxu0
        %v829 = vadd.f32 %v422, %v828
        %830 = vmatprep.mubr.bf16.mxu0 0
        %831 = vmatmul.mubr.bf16.gmra.mxu0 %v464
        %v832 = vpop.f32.mrf.mxu0
        %v833 = vadd.f32 %v418, %v832
        %v834 = vpop.f32.mrf.mxu0
        %v835 = vadd.f32 %v422, %v834
        %v836 = vpop.f32.mrf.mxu0
        %v837 = vadd.f32 %v418, %v836
        %v838 = vpop.f32.mrf.mxu0
        %v839 = vadd.f32 %v422, %v838
        %840 = vmatprep.mubr.bf16.mxu0 0
        %841 = vmatmul.mubr.bf16.gmra.mxu0 %v465
        %v842 = vpop.f32.mrf.mxu0
        %v843 = vadd.f32 %v418, %v842
        %v844 = vpop.f32.mrf.mxu0
        %v845 = vadd.f32 %v422, %v844
        %v846 = vpop.f32.mrf.mxu0
        %v847 = vadd.f32 %v418, %v846
        %v848 = vpop.f32.mrf.mxu0
        %v849 = vadd.f32 %v422, %v848
        %850 = vmatprep.mubr.bf16.mxu0 0
        %851 = vmatmul.mubr.bf16.gmra.mxu0 %v466
        %v852 = vpop.f32.mrf.mxu0
        %v853 = vadd.f32 %v418, %v852
        %v854 = vpop.f32.mrf.mxu0
        %v855 = vadd.f32 %v422, %v854
        %v856 = vpop.f32.mrf.mxu0
        %v857 = vadd.f32 %v418, %v856
        %v858 = vpop.f32.mrf.mxu0
        %v859 = vadd.f32 %v422, %v858
        %860 = vdwg.mxu0
        %v861 = vmul.f32 %v670, %v670
        %v862 = vmul.f32 %v672, %v672
        %v863 = vmul.f32 %v783, %v783
        %v864 = vmul.f32 %v785, %v785
        %v865 = vmul.f32 %v674, %v674
        %v866 = vmul.f32 %v676, %v676
        %v867 = vmul.f32 %v787, %v787
        %v868 = vmul.f32 %v789, %v789
        %v869 = vmul.f32 %v680, %v680
        %v870 = vmul.f32 %v682, %v682
        %v871 = vmul.f32 %v793, %v793
        %v872 = vmul.f32 %v795, %v795
        %v873 = vmul.f32 %v684, %v684
        %v874 = vmul.f32 %v686, %v686
        %v875 = vmul.f32 %v797, %v797
        %v876 = vmul.f32 %v799, %v799
        %v877 = vmul.f32 %v690, %v690
        %v878 = vmul.f32 %v692, %v692
        %v879 = vmul.f32 %v803, %v803
        %v880 = vmul.f32 %v805, %v805
        %v881 = vmul.f32 %v694, %v694
        %v882 = vmul.f32 %v696, %v696
        %v883 = vmul.f32 %v807, %v807
        %v884 = vmul.f32 %v809, %v809
        %v885 = vmul.f32 %v700, %v700
        %v886 = vmul.f32 %v702, %v702
        %v887 = vmul.f32 %v813, %v813
        %v888 = vmul.f32 %v815, %v815
        %v889 = vmul.f32 %v704, %v704
        %v890 = vmul.f32 %v706, %v706
        %v891 = vmul.f32 %v817, %v817
        %v892 = vmul.f32 %v819, %v819
        %v893 = vmul.f32 %v710, %v710
        %v894 = vmul.f32 %v712, %v712
        %v895 = vmul.f32 %v823, %v823
        %v896 = vmul.f32 %v825, %v825
        %v897 = vmul.f32 %v714, %v714
        %v898 = vmul.f32 %v716, %v716
        %v899 = vmul.f32 %v827, %v827
        %v900 = vmul.f32 %v829, %v829
        %v901 = vmul.f32 %v720, %v720
        %v902 = vmul.f32 %v722, %v722
        %v903 = vmul.f32 %v833, %v833
        %v904 = vmul.f32 %v835, %v835
        %v905 = vmul.f32 %v724, %v724
        %v906 = vmul.f32 %v726, %v726
        %v907 = vmul.f32 %v837, %v837
        %v908 = vmul.f32 %v839, %v839
        %v909 = vmul.f32 %v730, %v730
        %v910 = vmul.f32 %v732, %v732
        %v911 = vmul.f32 %v843, %v843
        %v912 = vmul.f32 %v845, %v845
        %v913 = vmul.f32 %v734, %v734
        %v914 = vmul.f32 %v736, %v736
        %v915 = vmul.f32 %v847, %v847
        %v916 = vmul.f32 %v849, %v849
        %v917 = vmul.f32 %v740, %v740
        %v918 = vmul.f32 %v742, %v742
        %v919 = vmul.f32 %v853, %v853
        %v920 = vmul.f32 %v855, %v855
        %v921 = vmul.f32 %v744, %v744
        %v922 = vmul.f32 %v746, %v746
        %v923 = vmul.f32 %v857, %v857
        %v924 = vmul.f32 %v859, %v859
        %v925 = vmul.f32 %v670, %v861
        %v926 = vmul.f32 %v672, %v862
        %v927 = vmul.f32 %v783, %v863
        %v928 = vmul.f32 %v785, %v864
        %v929 = vmul.f32 %v674, %v865
        %v930 = vmul.f32 %v676, %v866
        %v931 = vmul.f32 %v787, %v867
        %v932 = vmul.f32 %v789, %v868
        %v933 = vmul.f32 %v680, %v869
        %v934 = vmul.f32 %v682, %v870
        %v935 = vmul.f32 %v793, %v871
        %v936 = vmul.f32 %v795, %v872
        %v937 = vmul.f32 %v684, %v873
        %v938 = vmul.f32 %v686, %v874
        %v939 = vmul.f32 %v797, %v875
        %v940 = vmul.f32 %v799, %v876
        %v941 = vmul.f32 %v690, %v877
        %v942 = vmul.f32 %v692, %v878
        %v943 = vmul.f32 %v803, %v879
        %v944 = vmul.f32 %v805, %v880
        %v945 = vmul.f32 %v694, %v881
        %v946 = vmul.f32 %v696, %v882
        %v947 = vmul.f32 %v807, %v883
        %v948 = vmul.f32 %v809, %v884
        %v949 = vmul.f32 %v700, %v885
        %v950 = vmul.f32 %v702, %v886
        %v951 = vmul.f32 %v813, %v887
        %v952 = vmul.f32 %v815, %v888
        %v953 = vmul.f32 %v704, %v889
        %v954 = vmul.f32 %v706, %v890
        %v955 = vmul.f32 %v817, %v891
        %v956 = vmul.f32 %v819, %v892
        %v957 = vmul.f32 %v710, %v893
        %v958 = vmul.f32 %v712, %v894
        %v959 = vmul.f32 %v823, %v895
        %v960 = vmul.f32 %v825, %v896
        %v961 = vmul.f32 %v714, %v897
        %v962 = vmul.f32 %v716, %v898
        %v963 = vmul.f32 %v827, %v899
        %v964 = vmul.f32 %v829, %v900
        %v965 = vmul.f32 %v720, %v901
        %v966 = vmul.f32 %v722, %v902
        %v967 = vmul.f32 %v833, %v903
        %v968 = vmul.f32 %v835, %v904
        %v969 = vmul.f32 %v724, %v905
        %v970 = vmul.f32 %v726, %v906
        %v971 = vmul.f32 %v837, %v907
        %v972 = vmul.f32 %v839, %v908
        %v973 = vmul.f32 %v730, %v909
        %v974 = vmul.f32 %v732, %v910
        %v975 = vmul.f32 %v843, %v911
        %v976 = vmul.f32 %v845, %v912
        %v977 = vmul.f32 %v734, %v913
        %v978 = vmul.f32 %v736, %v914
        %v979 = vmul.f32 %v847, %v915
        %v980 = vmul.f32 %v849, %v916
        %v981 = vmul.f32 %v740, %v917
        %v982 = vmul.f32 %v742, %v918
        %v983 = vmul.f32 %v853, %v919
        %v984 = vmul.f32 %v855, %v920
        %v985 = vmul.f32 %v744, %v921
        %v986 = vmul.f32 %v746, %v922
        %v987 = vmul.f32 %v857, %v923
        %v988 = vmul.f32 %v859, %v924
        %v989 = vmul.f32 %v925, 0.044715
        %v990 = vmul.f32 %v926, 0.044715
        %v991 = vmul.f32 %v927, 0.044715
        %v992 = vmul.f32 %v928, 0.044715
        %v993 = vmul.f32 %v929, 0.044715
        %v994 = vmul.f32 %v930, 0.044715
        %v995 = vmul.f32 %v931, 0.044715
        %v996 = vmul.f32 %v932, 0.044715
        %v997 = vmul.f32 %v933, 0.044715
        %v998 = vmul.f32 %v934, 0.044715
        %v999 = vmul.f32 %v935, 0.044715
        %v1000 = vmul.f32 %v936, 0.044715
        %v1001 = vmul.f32 %v937, 0.044715
        %v1002 = vmul.f32 %v938, 0.044715
        %v1003 = vmul.f32 %v939, 0.044715
        %v1004 = vmul.f32 %v940, 0.044715
        %v1005 = vmul.f32 %v941, 0.044715
        %v1006 = vmul.f32 %v942, 0.044715
        %v1007 = vmul.f32 %v943, 0.044715
        %v1008 = vmul.f32 %v944, 0.044715
        %v1009 = vmul.f32 %v945, 0.044715
        %v1010 = vmul.f32 %v946, 0.044715
        %v1011 = vmul.f32 %v947, 0.044715
        %v1012 = vmul.f32 %v948, 0.044715
        %v1013 = vmul.f32 %v949, 0.044715
        %v1014 = vmul.f32 %v950, 0.044715
        %v1015 = vmul.f32 %v951, 0.044715
        %v1016 = vmul.f32 %v952, 0.044715
        %v1017 = vmul.f32 %v953, 0.044715
        %v1018 = vmul.f32 %v954, 0.044715
        %v1019 = vmul.f32 %v955, 0.044715
        %v1020 = vmul.f32 %v956, 0.044715
        %v1021 = vmul.f32 %v957, 0.044715
        %v1022 = vmul.f32 %v958, 0.044715
        %v1023 = vmul.f32 %v959, 0.044715
        %v1024 = vmul.f32 %v960, 0.044715
        %v1025 = vmul.f32 %v961, 0.044715
        %v1026 = vmul.f32 %v962, 0.044715
        %v1027 = vmul.f32 %v963, 0.044715
        %v1028 = vmul.f32 %v964, 0.044715
        %v1029 = vmul.f32 %v965, 0.044715
        %v1030 = vmul.f32 %v966, 0.044715
        %v1031 = vmul.f32 %v967, 0.044715
        %v1032 = vmul.f32 %v968, 0.044715
        %v1033 = vmul.f32 %v969, 0.044715
        %v1034 = vmul.f32 %v970, 0.044715
        %v1035 = vmul.f32 %v971, 0.044715
        %v1036 = vmul.f32 %v972, 0.044715
        %v1037 = vmul.f32 %v973, 0.044715
        %v1038 = vmul.f32 %v974, 0.044715
        %v1039 = vmul.f32 %v975, 0.044715
        %v1040 = vmul.f32 %v976, 0.044715
        %v1041 = vmul.f32 %v977, 0.044715
        %v1042 = vmul.f32 %v978, 0.044715
        %v1043 = vmul.f32 %v979, 0.044715
        %v1044 = vmul.f32 %v980, 0.044715
        %v1045 = vmul.f32 %v981, 0.044715
        %v1046 = vmul.f32 %v982, 0.044715
        %v1047 = vmul.f32 %v983, 0.044715
        %v1048 = vmul.f32 %v984, 0.044715
        %v1049 = vmul.f32 %v985, 0.044715
        %v1050 = vmul.f32 %v986, 0.044715
        %v1051 = vmul.f32 %v987, 0.044715
        %v1052 = vmul.f32 %v988, 0.044715
        %v1053 = vadd.f32 %v670, %v989
        %v1054 = vadd.f32 %v672, %v990
        %v1055 = vadd.f32 %v783, %v991
        %v1056 = vadd.f32 %v785, %v992
        %v1057 = vadd.f32 %v674, %v993
        %v1058 = vadd.f32 %v676, %v994
        %v1059 = vadd.f32 %v787, %v995
        %v1060 = vadd.f32 %v789, %v996
        %v1061 = vadd.f32 %v680, %v997
        %v1062 = vadd.f32 %v682, %v998
        %v1063 = vadd.f32 %v793, %v999
        %v1064 = vadd.f32 %v795, %v1000
        %v1065 = vadd.f32 %v684, %v1001
        %v1066 = vadd.f32 %v686, %v1002
        %v1067 = vadd.f32 %v797, %v1003
        %v1068 = vadd.f32 %v799, %v1004
        %v1069 = vadd.f32 %v690, %v1005
        %v1070 = vadd.f32 %v692, %v1006
        %v1071 = vadd.f32 %v803, %v1007
        %v1072 = vadd.f32 %v805, %v1008
        %v1073 = vadd.f32 %v694, %v1009
        %v1074 = vadd.f32 %v696, %v1010
        %v1075 = vadd.f32 %v807, %v1011
        %v1076 = vadd.f32 %v809, %v1012
        %v1077 = vadd.f32 %v700, %v1013
        %v1078 = vadd.f32 %v702, %v1014
        %v1079 = vadd.f32 %v813, %v1015
        %v1080 = vadd.f32 %v815, %v1016
        %v1081 = vadd.f32 %v704, %v1017
        %v1082 = vadd.f32 %v706, %v1018
        %v1083 = vadd.f32 %v817, %v1019
        %v1084 = vadd.f32 %v819, %v1020
        %v1085 = vadd.f32 %v710, %v1021
        %v1086 = vadd.f32 %v712, %v1022
        %v1087 = vadd.f32 %v823, %v1023
        %v1088 = vadd.f32 %v825, %v1024
        %v1089 = vadd.f32 %v714, %v1025
        %v1090 = vadd.f32 %v716, %v1026
        %v1091 = vadd.f32 %v827, %v1027
        %v1092 = vadd.f32 %v829, %v1028
        %v1093 = vadd.f32 %v720, %v1029
        %v1094 = vadd.f32 %v722, %v1030
        %v1095 = vadd.f32 %v833, %v1031
        %v1096 = vadd.f32 %v835, %v1032
        %v1097 = vadd.f32 %v724, %v1033
        %v1098 = vadd.f32 %v726, %v1034
        %v1099 = vadd.f32 %v837, %v1035
        %v1100 = vadd.f32 %v839, %v1036
        %v1101 = vadd.f32 %v730, %v1037
        %v1102 = vadd.f32 %v732, %v1038
        %v1103 = vadd.f32 %v843, %v1039
        %v1104 = vadd.f32 %v845, %v1040
        %v1105 = vadd.f32 %v734, %v1041
        %v1106 = vadd.f32 %v736, %v1042
        %v1107 = vadd.f32 %v847, %v1043
        %v1108 = vadd.f32 %v849, %v1044
        %v1109 = vadd.f32 %v740, %v1045
        %v1110 = vadd.f32 %v742, %v1046
        %v1111 = vadd.f32 %v853, %v1047
        %v1112 = vadd.f32 %v855, %v1048
        %v1113 = vadd.f32 %v744, %v1049
        %v1114 = vadd.f32 %v746, %v1050
        %v1115 = vadd.f32 %v857, %v1051
        %v1116 = vadd.f32 %v859, %v1052
        %v1117 = vmul.f32 %v1053, 0.7978846
        %v1118 = vmul.f32 %v1054, 0.7978846
        %v1119 = vmul.f32 %v1055, 0.7978846
        %v1120 = vmul.f32 %v1056, 0.7978846
        %v1121 = vmul.f32 %v1057, 0.7978846
        %v1122 = vmul.f32 %v1058, 0.7978846
        %v1123 = vmul.f32 %v1059, 0.7978846
        %v1124 = vmul.f32 %v1060, 0.7978846
        %v1125 = vmul.f32 %v1061, 0.7978846
        %v1126 = vmul.f32 %v1062, 0.7978846
        %v1127 = vmul.f32 %v1063, 0.7978846
        %v1128 = vmul.f32 %v1064, 0.7978846
        %v1129 = vmul.f32 %v1065, 0.7978846
        %v1130 = vmul.f32 %v1066, 0.7978846
        %v1131 = vmul.f32 %v1067, 0.7978846
        %v1132 = vmul.f32 %v1068, 0.7978846
        %v1133 = vmul.f32 %v1069, 0.7978846
        %v1134 = vmul.f32 %v1070, 0.7978846
        %v1135 = vmul.f32 %v1071, 0.7978846
        %v1136 = vmul.f32 %v1072, 0.7978846
        %v1137 = vmul.f32 %v1073, 0.7978846
        %v1138 = vmul.f32 %v1074, 0.7978846
        %v1139 = vmul.f32 %v1075, 0.7978846
        %v1140 = vmul.f32 %v1076, 0.7978846
        %v1141 = vmul.f32 %v1077, 0.7978846
        %v1142 = vmul.f32 %v1078, 0.7978846
        %v1143 = vmul.f32 %v1079, 0.7978846
        %v1144 = vmul.f32 %v1080, 0.7978846
        %v1145 = vmul.f32 %v1081, 0.7978846
        %v1146 = vmul.f32 %v1082, 0.7978846
        %v1147 = vmul.f32 %v1083, 0.7978846
        %v1148 = vmul.f32 %v1084, 0.7978846
        %v1149 = vmul.f32 %v1085, 0.7978846
        %v1150 = vmul.f32 %v1086, 0.7978846
        %v1151 = vmul.f32 %v1087, 0.7978846
        %v1152 = vmul.f32 %v1088, 0.7978846
        %v1153 = vmul.f32 %v1089, 0.7978846
        %v1154 = vmul.f32 %v1090, 0.7978846
        %v1155 = vmul.f32 %v1091, 0.7978846
        %v1156 = vmul.f32 %v1092, 0.7978846
        %v1157 = vmul.f32 %v1093, 0.7978846
        %v1158 = vmul.f32 %v1094, 0.7978846
        %v1159 = vmul.f32 %v1095, 0.7978846
        %v1160 = vmul.f32 %v1096, 0.7978846
        %v1161 = vmul.f32 %v1097, 0.7978846
        %v1162 = vmul.f32 %v1098, 0.7978846
        %v1163 = vmul.f32 %v1099, 0.7978846
        %v1164 = vmul.f32 %v1100, 0.7978846
        %v1165 = vmul.f32 %v1101, 0.7978846
        %v1166 = vmul.f32 %v1102, 0.7978846
        %v1167 = vmul.f32 %v1103, 0.7978846
        %v1168 = vmul.f32 %v1104, 0.7978846
        %v1169 = vmul.f32 %v1105, 0.7978846
        %v1170 = vmul.f32 %v1106, 0.7978846
        %v1171 = vmul.f32 %v1107, 0.7978846
        %v1172 = vmul.f32 %v1108, 0.7978846
        %v1173 = vmul.f32 %v1109, 0.7978846
        %v1174 = vmul.f32 %v1110, 0.7978846
        %v1175 = vmul.f32 %v1111, 0.7978846
        %v1176 = vmul.f32 %v1112, 0.7978846
        %v1177 = vmul.f32 %v1113, 0.7978846
        %v1178 = vmul.f32 %v1114, 0.7978846
        %v1179 = vmul.f32 %v1115, 0.7978846
        %v1180 = vmul.f32 %v1116, 0.7978846
        %v1181 = vtanh.pop %v1117
        %v1182 = vtanh.pop %v1118
        %v1183 = vtanh.pop %v1119
        %v1184 = vtanh.pop %v1120
        %v1185 = vtanh.pop %v1121
        %v1186 = vtanh.pop %v1122
        %v1187 = vtanh.pop %v1123
        %v1188 = vtanh.pop %v1124
        %v1189 = vtanh.pop %v1125
        %v1190 = vtanh.pop %v1126
        %v1191 = vtanh.pop %v1127
        %v1192 = vtanh.pop %v1128
        %v1193 = vtanh.pop %v1129
        %v1194 = vtanh.pop %v1130
        %v1195 = vtanh.pop %v1131
        %v1196 = vtanh.pop %v1132
        %v1197 = vtanh.pop %v1133
        %v1198 = vtanh.pop %v1134
        %v1199 = vtanh.pop %v1135
        %v1200 = vtanh.pop %v1136
        %v1201 = vtanh.pop %v1137
        %v1202 = vtanh.pop %v1138
        %v1203 = vtanh.pop %v1139
        %v1204 = vtanh.pop %v1140
        %v1205 = vtanh.pop %v1141
        %v1206 = vtanh.pop %v1142
        %v1207 = vtanh.pop %v1143
        %v1208 = vtanh.pop %v1144
        %v1209 = vtanh.pop %v1145
        %v1210 = vtanh.pop %v1146
        %v1211 = vtanh.pop %v1147
        %v1212 = vtanh.pop %v1148
        %v1213 = vtanh.pop %v1149
        %v1214 = vtanh.pop %v1150
        %v1215 = vtanh.pop %v1151
        %v1216 = vtanh.pop %v1152
        %v1217 = vtanh.pop %v1153
        %v1218 = vtanh.pop %v1154
        %v1219 = vtanh.pop %v1155
        %v1220 = vtanh.pop %v1156
        %v1221 = vtanh.pop %v1157
        %v1222 = vtanh.pop %v1158
        %v1223 = vtanh.pop %v1159
        %v1224 = vtanh.pop %v1160
        %v1225 = vtanh.pop %v1161
        %v1226 = vtanh.pop %v1162
        %v1227 = vtanh.pop %v1163
        %v1228 = vtanh.pop %v1164
        %v1229 = vtanh.pop %v1165
        %v1230 = vtanh.pop %v1166
        %v1231 = vtanh.pop %v1167
        %v1232 = vtanh.pop %v1168
        %v1233 = vtanh.pop %v1169
        %v1234 = vtanh.pop %v1170
        %v1235 = vtanh.pop %v1171
        %v1236 = vtanh.pop %v1172
        %v1237 = vtanh.pop %v1173
        %v1238 = vtanh.pop %v1174
        %v1239 = vtanh.pop %v1175
        %v1240 = vtanh.pop %v1176
        %v1241 = vtanh.pop %v1177
        %v1242 = vtanh.pop %v1178
        %v1243 = vtanh.pop %v1179
        %v1244 = vtanh.pop %v1180
        %v1245 = vadd.f32 %v1181, 1.0
        %v1246 = vadd.f32 %v1182, 1.0
        %v1247 = vadd.f32 %v1183, 1.0
        %v1248 = vadd.f32 %v1184, 1.0
        %v1249 = vadd.f32 %v1185, 1.0
        %v1250 = vadd.f32 %v1186, 1.0
        %v1251 = vadd.f32 %v1187, 1.0
        %v1252 = vadd.f32 %v1188, 1.0
        %v1253 = vadd.f32 %v1189, 1.0
        %v1254 = vadd.f32 %v1190, 1.0
        %v1255 = vadd.f32 %v1191, 1.0
        %v1256 = vadd.f32 %v1192, 1.0
        %v1257 = vadd.f32 %v1193, 1.0
        %v1258 = vadd.f32 %v1194, 1.0
        %v1259 = vadd.f32 %v1195, 1.0
        %v1260 = vadd.f32 %v1196, 1.0
        %v1261 = vadd.f32 %v1197, 1.0
        %v1262 = vadd.f32 %v1198, 1.0
        %v1263 = vadd.f32 %v1199, 1.0
        %v1264 = vadd.f32 %v1200, 1.0
        %v1265 = vadd.f32 %v1201, 1.0
        %v1266 = vadd.f32 %v1202, 1.0
        %v1267 = vadd.f32 %v1203, 1.0
        %v1268 = vadd.f32 %v1204, 1.0
        %v1269 = vadd.f32 %v1205, 1.0
        %v1270 = vadd.f32 %v1206, 1.0
        %v1271 = vadd.f32 %v1207, 1.0
        %v1272 = vadd.f32 %v1208, 1.0
        %v1273 = vadd.f32 %v1209, 1.0
        %v1274 = vadd.f32 %v1210, 1.0
        %v1275 = vadd.f32 %v1211, 1.0
        %v1276 = vadd.f32 %v1212, 1.0
        %v1277 = vadd.f32 %v1213, 1.0
        %v1278 = vadd.f32 %v1214, 1.0
        %v1279 = vadd.f32 %v1215, 1.0
        %v1280 = vadd.f32 %v1216, 1.0
        %v1281 = vadd.f32 %v1217, 1.0
        %v1282 = vadd.f32 %v1218, 1.0
        %v1283 = vadd.f32 %v1219, 1.0
        %v1284 = vadd.f32 %v1220, 1.0
        %v1285 = vadd.f32 %v1221, 1.0
        %v1286 = vadd.f32 %v1222, 1.0
        %v1287 = vadd.f32 %v1223, 1.0
        %v1288 = vadd.f32 %v1224, 1.0
        %v1289 = vadd.f32 %v1225, 1.0
        %v1290 = vadd.f32 %v1226, 1.0
        %v1291 = vadd.f32 %v1227, 1.0
        %v1292 = vadd.f32 %v1228, 1.0
        %v1293 = vadd.f32 %v1229, 1.0
        %v1294 = vadd.f32 %v1230, 1.0
        %v1295 = vadd.f32 %v1231, 1.0
        %v1296 = vadd.f32 %v1232, 1.0
        %v1297 = vadd.f32 %v1233, 1.0
        %v1298 = vadd.f32 %v1234, 1.0
        %v1299 = vadd.f32 %v1235, 1.0
        %v1300 = vadd.f32 %v1236, 1.0
        %v1301 = vadd.f32 %v1237, 1.0
        %v1302 = vadd.f32 %v1238, 1.0
        %v1303 = vadd.f32 %v1239, 1.0
        %v1304 = vadd.f32 %v1240, 1.0
        %v1305 = vadd.f32 %v1241, 1.0
        %v1306 = vadd.f32 %v1242, 1.0
        %v1307 = vadd.f32 %v1243, 1.0
        %v1308 = vadd.f32 %v1244, 1.0
        %v1309 = vmul.f32 %v1245, 0.5
        %v1310 = vmul.f32 %v1246, 0.5
        %v1311 = vmul.f32 %v1247, 0.5
        %v1312 = vmul.f32 %v1248, 0.5
        %v1313 = vmul.f32 %v1249, 0.5
        %v1314 = vmul.f32 %v1250, 0.5
        %v1315 = vmul.f32 %v1251, 0.5
        %v1316 = vmul.f32 %v1252, 0.5
        %v1317 = vmul.f32 %v1253, 0.5
        %v1318 = vmul.f32 %v1254, 0.5
        %v1319 = vmul.f32 %v1255, 0.5
        %v1320 = vmul.f32 %v1256, 0.5
        %v1321 = vmul.f32 %v1257, 0.5
        %v1322 = vmul.f32 %v1258, 0.5
        %v1323 = vmul.f32 %v1259, 0.5
        %v1324 = vmul.f32 %v1260, 0.5
        %v1325 = vmul.f32 %v1261, 0.5
        %v1326 = vmul.f32 %v1262, 0.5
        %v1327 = vmul.f32 %v1263, 0.5
        %v1328 = vmul.f32 %v1264, 0.5
        %v1329 = vmul.f32 %v1265, 0.5
        %v1330 = vmul.f32 %v1266, 0.5
        %v1331 = vmul.f32 %v1267, 0.5
        %v1332 = vmul.f32 %v1268, 0.5
        %v1333 = vmul.f32 %v1269, 0.5
        %v1334 = vmul.f32 %v1270, 0.5
        %v1335 = vmul.f32 %v1271, 0.5
        %v1336 = vmul.f32 %v1272, 0.5
        %v1337 = vmul.f32 %v1273, 0.5
        %v1338 = vmul.f32 %v1274, 0.5
        %v1339 = vmul.f32 %v1275, 0.5
        %v1340 = vmul.f32 %v1276, 0.5
        %v1341 = vmul.f32 %v1277, 0.5
        %v1342 = vmul.f32 %v1278, 0.5
        %v1343 = vmul.f32 %v1279, 0.5
        %v1344 = vmul.f32 %v1280, 0.5
        %v1345 = vmul.f32 %v1281, 0.5
        %v1346 = vmul.f32 %v1282, 0.5
        %v1347 = vmul.f32 %v1283, 0.5
        %v1348 = vmul.f32 %v1284, 0.5
        %v1349 = vmul.f32 %v1285, 0.5
        %v1350 = vmul.f32 %v1286, 0.5
        %v1351 = vmul.f32 %v1287, 0.5
        %v1352 = vmul.f32 %v1288, 0.5
        %v1353 = vmul.f32 %v1289, 0.5
        %v1354 = vmul.f32 %v1290, 0.5
        %v1355 = vmul.f32 %v1291, 0.5
        %v1356 = vmul.f32 %v1292, 0.5
        %v1357 = vmul.f32 %v1293, 0.5
        %v1358 = vmul.f32 %v1294, 0.5
        %v1359 = vmul.f32 %v1295, 0.5
        %v1360 = vmul.f32 %v1296, 0.5
        %v1361 = vmul.f32 %v1297, 0.5
        %v1362 = vmul.f32 %v1298, 0.5
        %v1363 = vmul.f32 %v1299, 0.5
        %v1364 = vmul.f32 %v1300, 0.5
        %v1365 = vmul.f32 %v1301, 0.5
        %v1366 = vmul.f32 %v1302, 0.5
        %v1367 = vmul.f32 %v1303, 0.5
        %v1368 = vmul.f32 %v1304, 0.5
        %v1369 = vmul.f32 %v1305, 0.5
        %v1370 = vmul.f32 %v1306, 0.5
        %v1371 = vmul.f32 %v1307, 0.5
        %v1372 = vmul.f32 %v1308, 0.5
        %v1373 = vmul.f32 %v670, %v1309
        %v1374 = vmul.f32 %v672, %v1310
        %v1375 = vmul.f32 %v783, %v1311
        %v1376 = vmul.f32 %v785, %v1312
        %v1377 = vmul.f32 %v674, %v1313
        %v1378 = vmul.f32 %v676, %v1314
        %v1379 = vmul.f32 %v787, %v1315
        %v1380 = vmul.f32 %v789, %v1316
        %v1381 = vmul.f32 %v680, %v1317
        %v1382 = vmul.f32 %v682, %v1318
        %v1383 = vmul.f32 %v793, %v1319
        %v1384 = vmul.f32 %v795, %v1320
        %v1385 = vmul.f32 %v684, %v1321
        %v1386 = vmul.f32 %v686, %v1322
        %v1387 = vmul.f32 %v797, %v1323
        %v1388 = vmul.f32 %v799, %v1324
        %v1389 = vmul.f32 %v690, %v1325
        %v1390 = vmul.f32 %v692, %v1326
        %v1391 = vmul.f32 %v803, %v1327
        %v1392 = vmul.f32 %v805, %v1328
        %v1393 = vmul.f32 %v694, %v1329
        %v1394 = vmul.f32 %v696, %v1330
        %v1395 = vmul.f32 %v807, %v1331
        %v1396 = vmul.f32 %v809, %v1332
        %v1397 = vmul.f32 %v700, %v1333
        %v1398 = vmul.f32 %v702, %v1334
        %v1399 = vmul.f32 %v813, %v1335
        %v1400 = vmul.f32 %v815, %v1336
        %v1401 = vmul.f32 %v704, %v1337
        %v1402 = vmul.f32 %v706, %v1338
        %v1403 = vmul.f32 %v817, %v1339
        %v1404 = vmul.f32 %v819, %v1340
        %v1405 = vmul.f32 %v710, %v1341
        %v1406 = vmul.f32 %v712, %v1342
        %v1407 = vmul.f32 %v823, %v1343
        %v1408 = vmul.f32 %v825, %v1344
        %v1409 = vmul.f32 %v714, %v1345
        %v1410 = vmul.f32 %v716, %v1346
        %v1411 = vmul.f32 %v827, %v1347
        %v1412 = vmul.f32 %v829, %v1348
        %v1413 = vmul.f32 %v720, %v1349
        %v1414 = vmul.f32 %v722, %v1350
        %v1415 = vmul.f32 %v833, %v1351
        %v1416 = vmul.f32 %v835, %v1352
        %v1417 = vmul.f32 %v724, %v1353
        %v1418 = vmul.f32 %v726, %v1354
        %v1419 = vmul.f32 %v837, %v1355
        %v1420 = vmul.f32 %v839, %v1356
        %v1421 = vmul.f32 %v730, %v1357
        %v1422 = vmul.f32 %v732, %v1358
        %v1423 = vmul.f32 %v843, %v1359
        %v1424 = vmul.f32 %v845, %v1360
        %v1425 = vmul.f32 %v734, %v1361
        %v1426 = vmul.f32 %v736, %v1362
        %v1427 = vmul.f32 %v847, %v1363
        %v1428 = vmul.f32 %v849, %v1364
        %v1429 = vmul.f32 %v740, %v1365
        %v1430 = vmul.f32 %v742, %v1366
        %v1431 = vmul.f32 %v853, %v1367
        %v1432 = vmul.f32 %v855, %v1368
        %v1433 = vmul.f32 %v744, %v1369
        %v1434 = vmul.f32 %v746, %v1370
        %v1435 = vmul.f32 %v857, %v1371
        %v1436 = vmul.f32 %v859, %v1372
        %v1437 = vld [vmem:[#allocation2] sm:$0xff]
        %v1438 = vld [vmem:[#allocation2 + $0x8] sm:$0xff]
        %v1439 = vld [vmem:[#allocation2 + $0x10] sm:$0xff]
        %v1440 = vld [vmem:[#allocation2 + $0x18] sm:$0xff]
        %v1441 = vld [vmem:[#allocation2 + $0x20] sm:$0xff]
        %v1442 = vld [vmem:[#allocation2 + $0x28] sm:$0xff]
        %v1443 = vld [vmem:[#allocation2 + $0x30] sm:$0xff]
        %v1444 = vld [vmem:[#allocation2 + $0x38] sm:$0xff]
        %v1445 = vld [vmem:[#allocation2 + $0x40] sm:$0xff]
        %v1446 = vld [vmem:[#allocation2 + $0x48] sm:$0xff]
        %v1447 = vld [vmem:[#allocation2 + $0x50] sm:$0xff]
        %v1448 = vld [vmem:[#allocation2 + $0x58] sm:$0xff]
        %v1449 = vld [vmem:[#allocation2 + $0x60] sm:$0xff]
        %v1450 = vld [vmem:[#allocation2 + $0x68] sm:$0xff]
        %v1451 = vld [vmem:[#allocation2 + $0x70] sm:$0xff]
        %v1452 = vld [vmem:[#allocation2 + $0x78] sm:$0xff]
        %v1453 = vpack.c.bf16 %v1377, %v1373
        %v1454 = vpack.c.bf16 %v1378, %v1374
        %v1455 = vpack.c.bf16 %v1379, %v1375
        %v1456 = vpack.c.bf16 %v1380, %v1376
        %v1457 = vpack.c.bf16 %v1385, %v1381
        %v1458 = vpack.c.bf16 %v1386, %v1382
        %v1459 = vpack.c.bf16 %v1387, %v1383
        %v1460 = vpack.c.bf16 %v1388, %v1384
        %v1461 = vpack.c.bf16 %v1393, %v1389
        %v1462 = vpack.c.bf16 %v1394, %v1390
        %v1463 = vpack.c.bf16 %v1395, %v1391
        %v1464 = vpack.c.bf16 %v1396, %v1392
        %v1465 = vpack.c.bf16 %v1401, %v1397
        %v1466 = vpack.c.bf16 %v1402, %v1398
        %v1467 = vpack.c.bf16 %v1403, %v1399
        %v1468 = vpack.c.bf16 %v1404, %v1400
        %v1469 = vpack.c.bf16 %v1409, %v1405
        %v1470 = vpack.c.bf16 %v1410, %v1406
        %v1471 = vpack.c.bf16 %v1411, %v1407
        %v1472 = vpack.c.bf16 %v1412, %v1408
        %v1473 = vpack.c.bf16 %v1417, %v1413
        %v1474 = vpack.c.bf16 %v1418, %v1414
        %v1475 = vpack.c.bf16 %v1419, %v1415
        %v1476 = vpack.c.bf16 %v1420, %v1416
        %v1477 = vpack.c.bf16 %v1425, %v1421
        %v1478 = vpack.c.bf16 %v1426, %v1422
        %v1479 = vpack.c.bf16 %v1427, %v1423
        %v1480 = vpack.c.bf16 %v1428, %v1424
        %v1481 = vpack.c.bf16 %v1433, %v1429
        %v1482 = vpack.c.bf16 %v1434, %v1430
        %v1483 = vpack.c.bf16 %v1435, %v1431
        %v1484 = vpack.c.bf16 %v1436, %v1432
        %v1485 = vld [vmem:[%s326] sm:$0xf]
        %v1486 = vld [vmem:[%s326 + $0x4] sm:$0xf]
        %v1487 = vld [vmem:[%s326 + $0x8] sm:$0xf]
        %v1488 = vld [vmem:[%s326 + $0xc] sm:$0xf]
        %v1489 = vld [vmem:[%s326 + $0x10] sm:$0xf]
        %v1490 = vld [vmem:[%s326 + $0x14] sm:$0xf]
        %v1491 = vld [vmem:[%s326 + $0x18] sm:$0xf]
        %v1492 = vld [vmem:[%s326 + $0x1c] sm:$0xf]
        %v1493 = vld [vmem:[%s326 + $0x20] sm:$0xf]
        %v1494 = vld [vmem:[%s326 + $0x24] sm:$0xf]
        %v1495 = vld [vmem:[%s326 + $0x28] sm:$0xf]
        %v1496 = vld [vmem:[%s326 + $0x2c] sm:$0xf]
        %v1497 = vld [vmem:[%s326 + $0x30] sm:$0xf]
        %v1498 = vld [vmem:[%s326 + $0x34] sm:$0xf]
        %v1499 = vld [vmem:[%s326 + $0x38] sm:$0xf]
        %v1500 = vld [vmem:[%s326 + $0x3c] sm:$0xf]
        %v1501 = vld [vmem:[%s326 + $0x40] sm:$0xf]
        %v1502 = vld [vmem:[%s326 + $0x44] sm:$0xf]
        %v1503 = vld [vmem:[%s326 + $0x48] sm:$0xf]
        %v1504 = vld [vmem:[%s326 + $0x4c] sm:$0xf]
        %v1505 = vld [vmem:[%s326 + $0x50] sm:$0xf]
        %v1506 = vld [vmem:[%s326 + $0x54] sm:$0xf]
        %v1507 = vld [vmem:[%s326 + $0x58] sm:$0xf]
        %v1508 = vld [vmem:[%s326 + $0x5c] sm:$0xf]
        %v1509 = vld [vmem:[%s326 + $0x60] sm:$0xf]
        %v1510 = vld [vmem:[%s326 + $0x64] sm:$0xf]
        %v1511 = vld [vmem:[%s326 + $0x68] sm:$0xf]
        %v1512 = vld [vmem:[%s326 + $0x6c] sm:$0xf]
        %v1513 = vld [vmem:[%s326 + $0x70] sm:$0xf]
        %v1514 = vld [vmem:[%s326 + $0x74] sm:$0xf]
        %v1515 = vld [vmem:[%s326 + $0x78] sm:$0xf]
        %v1516 = vld [vmem:[%s326 + $0x7c] sm:$0xf]
        %v1517 = vld [vmem:[%s326 + $0x80] sm:$0xf]
        %v1518 = vld [vmem:[%s326 + $0x84] sm:$0xf]
        %v1519 = vld [vmem:[%s326 + $0x88] sm:$0xf]
        %v1520 = vld [vmem:[%s326 + $0x8c] sm:$0xf]
        %v1521 = vld [vmem:[%s326 + $0x90] sm:$0xf]
        %v1522 = vld [vmem:[%s326 + $0x94] sm:$0xf]
        %v1523 = vld [vmem:[%s326 + $0x98] sm:$0xf]
        %v1524 = vld [vmem:[%s326 + $0x9c] sm:$0xf]
        %v1525 = vld [vmem:[%s326 + $0xa0] sm:$0xf]
        %v1526 = vld [vmem:[%s326 + $0xa4] sm:$0xf]
        %v1527 = vld [vmem:[%s326 + $0xa8] sm:$0xf]
        %v1528 = vld [vmem:[%s326 + $0xac] sm:$0xf]
        %v1529 = vld [vmem:[%s326 + $0xb0] sm:$0xf]
        %v1530 = vld [vmem:[%s326 + $0xb4] sm:$0xf]
        %v1531 = vld [vmem:[%s326 + $0xb8] sm:$0xf]
        %v1532 = vld [vmem:[%s326 + $0xbc] sm:$0xf]
        %v1533 = vld [vmem:[%s326 + $0xc0] sm:$0xf]
        %v1534 = vld [vmem:[%s326 + $0xc4] sm:$0xf]
        %v1535 = vld [vmem:[%s326 + $0xc8] sm:$0xf]
        %v1536 = vld [vmem:[%s326 + $0xcc] sm:$0xf]
        %v1537 = vld [vmem:[%s326 + $0xd0] sm:$0xf]
        %v1538 = vld [vmem:[%s326 + $0xd4] sm:$0xf]
        %v1539 = vld [vmem:[%s326 + $0xd8] sm:$0xf]
        %v1540 = vld [vmem:[%s326 + $0xdc] sm:$0xf]
        %v1541 = vld [vmem:[%s326 + $0xe0] sm:$0xf]
        %v1542 = vld [vmem:[%s326 + $0xe4] sm:$0xf]
        %v1543 = vld [vmem:[%s326 + $0xe8] sm:$0xf]
        %v1544 = vld [vmem:[%s326 + $0xec] sm:$0xf]
        %v1545 = vld [vmem:[%s326 + $0xf0] sm:$0xf]
        %v1546 = vld [vmem:[%s326 + $0xf4] sm:$0xf]
        %v1547 = vld [vmem:[%s326 + $0xf8] sm:$0xf]
        %v1548 = vld [vmem:[%s326 + $0xfc] sm:$0xf]
        %v1613 = vunpack.c.l.b16 %v1485
        %v1614 = vunpack.c.l.b16 %v1486
        %v1615 = vunpack.c.l.b16 %v1487
        %v1616 = vunpack.c.l.b16 %v1488
        %v1617 = vunpack.c.l.b16 %v1489
        %v1618 = vunpack.c.l.b16 %v1490
        %v1619 = vunpack.c.l.b16 %v1491
        %v1620 = vunpack.c.l.b16 %v1492
        %v1621 = vunpack.c.l.b16 %v1493
        %v1622 = vunpack.c.l.b16 %v1494
        %v1623 = vunpack.c.l.b16 %v1495
        %v1624 = vunpack.c.l.b16 %v1496
        %v1625 = vunpack.c.l.b16 %v1497
        %v1626 = vunpack.c.l.b16 %v1498
        %v1627 = vunpack.c.l.b16 %v1499
        %v1628 = vunpack.c.l.b16 %v1500
        %v1629 = vunpack.c.l.b16 %v1501
        %v1630 = vunpack.c.l.b16 %v1502
        %v1631 = vunpack.c.l.b16 %v1503
        %v1632 = vunpack.c.l.b16 %v1504
        %v1633 = vunpack.c.l.b16 %v1505
        %v1634 = vunpack.c.l.b16 %v1506
        %v1635 = vunpack.c.l.b16 %v1507
        %v1636 = vunpack.c.l.b16 %v1508
        %v1637 = vunpack.c.l.b16 %v1509
        %v1638 = vunpack.c.l.b16 %v1510
        %v1639 = vunpack.c.l.b16 %v1511
        %v1640 = vunpack.c.l.b16 %v1512
        %v1641 = vunpack.c.l.b16 %v1513
        %v1642 = vunpack.c.l.b16 %v1514
        %v1643 = vunpack.c.l.b16 %v1515
        %v1644 = vunpack.c.l.b16 %v1516
        %v1645 = vunpack.c.l.b16 %v1517
        %v1646 = vunpack.c.l.b16 %v1518
        %v1647 = vunpack.c.l.b16 %v1519
        %v1648 = vunpack.c.l.b16 %v1520
        %v1649 = vunpack.c.l.b16 %v1521
        %v1650 = vunpack.c.l.b16 %v1522
        %v1651 = vunpack.c.l.b16 %v1523
        %v1652 = vunpack.c.l.b16 %v1524
        %v1653 = vunpack.c.l.b16 %v1525
        %v1654 = vunpack.c.l.b16 %v1526
        %v1655 = vunpack.c.l.b16 %v1527
        %v1656 = vunpack.c.l.b16 %v1528
        %v1657 = vunpack.c.l.b16 %v1529
        %v1658 = vunpack.c.l.b16 %v1530
        %v1659 = vunpack.c.l.b16 %v1531
        %v1660 = vunpack.c.l.b16 %v1532
        %v1661 = vunpack.c.l.b16 %v1533
        %v1662 = vunpack.c.l.b16 %v1534
        %v1663 = vunpack.c.l.b16 %v1535
        %v1664 = vunpack.c.l.b16 %v1536
        %v1665 = vunpack.c.l.b16 %v1537
        %v1666 = vunpack.c.l.b16 %v1538
        %v1667 = vunpack.c.l.b16 %v1539
        %v1668 = vunpack.c.l.b16 %v1540
        %v1669 = vunpack.c.l.b16 %v1541
        %v1670 = vunpack.c.l.b16 %v1542
        %v1671 = vunpack.c.l.b16 %v1543
        %v1672 = vunpack.c.l.b16 %v1544
        %v1673 = vunpack.c.l.b16 %v1545
        %v1674 = vunpack.c.l.b16 %v1546
        %v1675 = vunpack.c.l.b16 %v1547
        %v1676 = vunpack.c.l.b16 %v1548
        %v1677 = vpack.c.b16 %v1614, %v1613
        %v1678 = vpack.c.b16 %v1616, %v1615
        %v1679 = vpack.c.b16 %v1618, %v1617
        %v1680 = vpack.c.b16 %v1620, %v1619
        %v1681 = vpack.c.b16 %v1622, %v1621
        %v1682 = vpack.c.b16 %v1624, %v1623
        %v1683 = vpack.c.b16 %v1626, %v1625
        %v1684 = vpack.c.b16 %v1628, %v1627
        %v1685 = vpack.c.b16 %v1630, %v1629
        %v1686 = vpack.c.b16 %v1632, %v1631
        %v1687 = vpack.c.b16 %v1634, %v1633
        %v1688 = vpack.c.b16 %v1636, %v1635
        %v1689 = vpack.c.b16 %v1638, %v1637
        %v1690 = vpack.c.b16 %v1640, %v1639
        %v1691 = vpack.c.b16 %v1642, %v1641
        %v1692 = vpack.c.b16 %v1644, %v1643
        %v1693 = vpack.c.b16 %v1646, %v1645
        %v1694 = vpack.c.b16 %v1648, %v1647
        %v1695 = vpack.c.b16 %v1650, %v1649
        %v1696 = vpack.c.b16 %v1652, %v1651
        %v1697 = vpack.c.b16 %v1654, %v1653
        %v1698 = vpack.c.b16 %v1656, %v1655
        %v1699 = vpack.c.b16 %v1658, %v1657
        %v1700 = vpack.c.b16 %v1660, %v1659
        %v1701 = vpack.c.b16 %v1662, %v1661
        %v1702 = vpack.c.b16 %v1664, %v1663
        %v1703 = vpack.c.b16 %v1666, %v1665
        %v1704 = vpack.c.b16 %v1668, %v1667
        %v1705 = vpack.c.b16 %v1670, %v1669
        %v1706 = vpack.c.b16 %v1672, %v1671
        %v1707 = vpack.c.b16 %v1674, %v1673
        %v1708 = vpack.c.b16 %v1676, %v1675
        %1741 = vmatprep.subr.bf16.mxu0 0
        %1742 = vmatpush1.bf16.msra.mxu0 %v1684
        %1743 = vmatprep.subr.bf16.mxu0 0
        %1744 = vmatpush1.bf16.msra.mxu0 %v1683
        %1745 = vmatprep.subr.bf16.mxu0 0
        %1746 = vmatpush1.bf16.msra.mxu0 %v1682
        %1747 = vmatprep.subr.bf16.mxu0 0
        %1748 = vmatpush1.bf16.msra.mxu0 %v1681
        %1749 = vmatprep.subr.bf16.mxu0 0
        %1750 = vmatpush1.bf16.msra.mxu0 %v1680
        %1751 = vmatprep.subr.bf16.mxu0 0
        %1752 = vmatpush1.bf16.msra.mxu0 %v1679
        %1753 = vmatprep.subr.bf16.mxu0 0
        %1754 = vmatpush1.bf16.msra.mxu0 %v1678
        %1755 = vmatprep.subr.bf16.mxu0 0
        %1756 = vmatpush1.bf16.msra.mxu0 %v1677
        %1757 = vmatprep.subr.bf16.mxu0 0
        %1758 = vmatpush2.bf16.msra.mxu0 %v1692
        %1759 = vmatprep.subr.bf16.mxu0 0
        %1760 = vmatpush2.bf16.msra.mxu0 %v1691
        %1761 = vmatprep.subr.bf16.mxu0 0
        %1762 = vmatpush2.bf16.msra.mxu0 %v1690
        %1763 = vmatprep.subr.bf16.mxu0 0
        %1764 = vmatpush2.bf16.msra.mxu0 %v1689
        %1765 = vmatprep.subr.bf16.mxu0 0
        %1766 = vmatpush2.bf16.msra.mxu0 %v1688
        %1767 = vmatprep.subr.bf16.mxu0 0
        %1768 = vmatpush2.bf16.msra.mxu0 %v1687
        %1769 = vmatprep.subr.bf16.mxu0 0
        %1770 = vmatpush2.bf16.msra.mxu0 %v1686
        %1771 = vmatprep.subr.bf16.mxu0 0
        %1772 = vmatpush2.bf16.msra.mxu0 %v1685
        %1773 = vmatprep.mubr.bf16.mxu0 %v1454
        %1774 = vmatmul.mubr.bf16.gmra.mxu0 %v1453
        %v1775 = vpop.f32.mrf.mxu0
        %v1776 = vadd.f32 0.0, %v1775
        %v1777 = vpop.f32.mrf.mxu0
        %v1778 = vpop.f32.mrf.mxu0
        %v1779 = vadd.f32 0.0, %v1778
        %v1780 = vpop.f32.mrf.mxu0
        %1781 = vmatprep.mubr.bf16.mxu0 %v1458
        %1782 = vmatmul.mubr.bf16.gmra.mxu0 %v1457
        %v1783 = vpop.f32.mrf.mxu0
        %v1784 = vadd.f32 0.0, %v1783
        %v1785 = vpop.f32.mrf.mxu0
        %v1786 = vpop.f32.mrf.mxu0
        %v1787 = vadd.f32 0.0, %v1786
        %v1788 = vpop.f32.mrf.mxu0
        %1789 = vmatprep.mubr.bf16.mxu0 %v1462
        %1790 = vmatmul.mubr.bf16.gmra.mxu0 %v1461
        %v1791 = vpop.f32.mrf.mxu0
        %v1792 = vadd.f32 0.0, %v1791
        %v1793 = vpop.f32.mrf.mxu0
        %v1794 = vpop.f32.mrf.mxu0
        %v1795 = vadd.f32 0.0, %v1794
        %v1796 = vpop.f32.mrf.mxu0
        %1797 = vmatprep.mubr.bf16.mxu0 %v1466
        %1798 = vmatmul.mubr.bf16.gmra.mxu0 %v1465
        %v1799 = vpop.f32.mrf.mxu0
        %v1800 = vadd.f32 0.0, %v1799
        %v1801 = vpop.f32.mrf.mxu0
        %v1802 = vpop.f32.mrf.mxu0
        %v1803 = vadd.f32 0.0, %v1802
        %v1804 = vpop.f32.mrf.mxu0
        %1805 = vmatprep.mubr.bf16.mxu0 %v1470
        %1806 = vmatmul.mubr.bf16.gmra.mxu0 %v1469
        %v1807 = vpop.f32.mrf.mxu0
        %v1808 = vadd.f32 0.0, %v1807
        %v1809 = vpop.f32.mrf.mxu0
        %v1810 = vpop.f32.mrf.mxu0
        %v1811 = vadd.f32 0.0, %v1810
        %v1812 = vpop.f32.mrf.mxu0
        %1813 = vmatprep.mubr.bf16.mxu0 %v1474
        %1814 = vmatmul.mubr.bf16.gmra.mxu0 %v1473
        %v1815 = vpop.f32.mrf.mxu0
        %v1816 = vadd.f32 0.0, %v1815
        %v1817 = vpop.f32.mrf.mxu0
        %v1818 = vpop.f32.mrf.mxu0
        %v1819 = vadd.f32 0.0, %v1818
        %v1820 = vpop.f32.mrf.mxu0
        %1821 = vmatprep.mubr.bf16.mxu0 %v1478
        %1822 = vmatmul.mubr.bf16.gmra.mxu0 %v1477
        %v1823 = vpop.f32.mrf.mxu0
        %v1824 = vadd.f32 0.0, %v1823
        %v1825 = vpop.f32.mrf.mxu0
        %v1826 = vpop.f32.mrf.mxu0
        %v1827 = vadd.f32 0.0, %v1826
        %v1828 = vpop.f32.mrf.mxu0
        %1829 = vmatprep.mubr.bf16.mxu0 %v1482
        %1830 = vmatmul.mubr.bf16.gmra.mxu0 %v1481
        %v1831 = vpop.f32.mrf.mxu0
        %v1832 = vadd.f32 0.0, %v1831
        %v1833 = vpop.f32.mrf.mxu0
        %v1834 = vpop.f32.mrf.mxu0
        %v1835 = vadd.f32 0.0, %v1834
        %v1836 = vpop.f32.mrf.mxu0
        %1837 = vdwg.mxu0
        %1838 = vmatprep.subr.bf16.mxu0 0
        %1839 = vmatpush1.bf16.msra.mxu0 %v1700
        %1840 = vmatprep.subr.bf16.mxu0 0
        %1841 = vmatpush1.bf16.msra.mxu0 %v1699
        %1842 = vmatprep.subr.bf16.mxu0 0
        %1843 = vmatpush1.bf16.msra.mxu0 %v1698
        %1844 = vmatprep.subr.bf16.mxu0 0
        %1845 = vmatpush1.bf16.msra.mxu0 %v1697
        %1846 = vmatprep.subr.bf16.mxu0 0
        %1847 = vmatpush1.bf16.msra.mxu0 %v1696
        %1848 = vmatprep.subr.bf16.mxu0 0
        %1849 = vmatpush1.bf16.msra.mxu0 %v1695
        %1850 = vmatprep.subr.bf16.mxu0 0
        %1851 = vmatpush1.bf16.msra.mxu0 %v1694
        %1852 = vmatprep.subr.bf16.mxu0 0
        %1853 = vmatpush1.bf16.msra.mxu0 %v1693
        %1854 = vmatprep.subr.bf16.mxu0 0
        %1855 = vmatpush2.bf16.msra.mxu0 %v1708
        %1856 = vmatprep.subr.bf16.mxu0 0
        %1857 = vmatpush2.bf16.msra.mxu0 %v1707
        %1858 = vmatprep.subr.bf16.mxu0 0
        %1859 = vmatpush2.bf16.msra.mxu0 %v1706
        %1860 = vmatprep.subr.bf16.mxu0 0
        %1861 = vmatpush2.bf16.msra.mxu0 %v1705
        %1862 = vmatprep.subr.bf16.mxu0 0
        %1863 = vmatpush2.bf16.msra.mxu0 %v1704
        %1864 = vmatprep.subr.bf16.mxu0 0
        %1865 = vmatpush2.bf16.msra.mxu0 %v1703
        %1866 = vmatprep.subr.bf16.mxu0 0
        %1867 = vmatpush2.bf16.msra.mxu0 %v1702
        %1868 = vmatprep.subr.bf16.mxu0 0
        %1869 = vmatpush2.bf16.msra.mxu0 %v1701
        %1870 = vmatprep.mubr.bf16.mxu0 %v1456
        %1871 = vmatmul.mubr.bf16.gmra.mxu0 %v1455
        %v1872 = vpop.f32.mrf.mxu0
        %v1873 = vadd.f32 %v1776, %v1872
        %v1874 = vpop.f32.mrf.mxu0
        %v1875 = vpop.f32.mrf.mxu0
        %v1876 = vadd.f32 %v1779, %v1875
        %v1877 = vpop.f32.mrf.mxu0
        %1878 = vmatprep.mubr.bf16.mxu0 %v1460
        %1879 = vmatmul.mubr.bf16.gmra.mxu0 %v1459
        %v1880 = vpop.f32.mrf.mxu0
        %v1881 = vadd.f32 %v1784, %v1880
        %v1882 = vpop.f32.mrf.mxu0
        %v1883 = vpop.f32.mrf.mxu0
        %v1884 = vadd.f32 %v1787, %v1883
        %v1885 = vpop.f32.mrf.mxu0
        %1886 = vmatprep.mubr.bf16.mxu0 %v1464
        %1887 = vmatmul.mubr.bf16.gmra.mxu0 %v1463
        %v1888 = vpop.f32.mrf.mxu0
        %v1889 = vadd.f32 %v1792, %v1888
        %v1890 = vpop.f32.mrf.mxu0
        %v1891 = vpop.f32.mrf.mxu0
        %v1892 = vadd.f32 %v1795, %v1891
        %v1893 = vpop.f32.mrf.mxu0
        %1894 = vmatprep.mubr.bf16.mxu0 %v1468
        %1895 = vmatmul.mubr.bf16.gmra.mxu0 %v1467
        %v1896 = vpop.f32.mrf.mxu0
        %v1897 = vadd.f32 %v1800, %v1896
        %v1898 = vpop.f32.mrf.mxu0
        %v1899 = vpop.f32.mrf.mxu0
        %v1900 = vadd.f32 %v1803, %v1899
        %v1901 = vpop.f32.mrf.mxu0
        %1902 = vmatprep.mubr.bf16.mxu0 %v1472
        %1903 = vmatmul.mubr.bf16.gmra.mxu0 %v1471
        %v1904 = vpop.f32.mrf.mxu0
        %v1905 = vadd.f32 %v1808, %v1904
        %v1906 = vpop.f32.mrf.mxu0
        %v1907 = vpop.f32.mrf.mxu0
        %v1908 = vadd.f32 %v1811, %v1907
        %v1909 = vpop.f32.mrf.mxu0
        %1910 = vmatprep.mubr.bf16.mxu0 %v1476
        %1911 = vmatmul.mubr.bf16.gmra.mxu0 %v1475
        %v1912 = vpop.f32.mrf.mxu0
        %v1913 = vadd.f32 %v1816, %v1912
        %v1914 = vpop.f32.mrf.mxu0
        %v1915 = vpop.f32.mrf.mxu0
        %v1916 = vadd.f32 %v1819, %v1915
        %v1917 = vpop.f32.mrf.mxu0
        %1918 = vmatprep.mubr.bf16.mxu0 %v1480
        %1919 = vmatmul.mubr.bf16.gmra.mxu0 %v1479
        %v1920 = vpop.f32.mrf.mxu0
        %v1921 = vadd.f32 %v1824, %v1920
        %v1922 = vpop.f32.mrf.mxu0
        %v1923 = vpop.f32.mrf.mxu0
        %v1924 = vadd.f32 %v1827, %v1923
        %v1925 = vpop.f32.mrf.mxu0
        %1926 = vmatprep.mubr.bf16.mxu0 %v1484
        %1927 = vmatmul.mubr.bf16.gmra.mxu0 %v1483
        %v1928 = vpop.f32.mrf.mxu0
        %v1929 = vadd.f32 %v1832, %v1928
        %v1930 = vpop.f32.mrf.mxu0
        %v1931 = vpop.f32.mrf.mxu0
        %v1932 = vadd.f32 %v1835, %v1931
        %v1933 = vpop.f32.mrf.mxu0
        %1934 = vdwg.mxu0
        %v1935 = vadd.f32 %v1437, %v1873
        %v1936 = vadd.f32 %v1438, %v1876
        %v1937 = vadd.f32 %v1439, %v1881
        %v1938 = vadd.f32 %v1440, %v1884
        %v1939 = vadd.f32 %v1441, %v1889
        %v1940 = vadd.f32 %v1442, %v1892
        %v1941 = vadd.f32 %v1443, %v1897
        %v1942 = vadd.f32 %v1444, %v1900
        %v1943 = vadd.f32 %v1445, %v1905
        %v1944 = vadd.f32 %v1446, %v1908
        %v1945 = vadd.f32 %v1447, %v1913
        %v1946 = vadd.f32 %v1448, %v1916
        %v1947 = vadd.f32 %v1449, %v1921
        %v1948 = vadd.f32 %v1450, %v1924
        %v1949 = vadd.f32 %v1451, %v1929
        %v1950 = vadd.f32 %v1452, %v1932
        %1951 = vst [vmem:[#allocation2] sm:$0xff] %v1935
        %1952 = vst [vmem:[#allocation2 + $0x8] sm:$0xff] %v1936
        %1953 = vst [vmem:[#allocation2 + $0x10] sm:$0xff] %v1937
        %1954 = vst [vmem:[#allocation2 + $0x18] sm:$0xff] %v1938
        %1955 = vst [vmem:[#allocation2 + $0x20] sm:$0xff] %v1939
        %1956 = vst [vmem:[#allocation2 + $0x28] sm:$0xff] %v1940
        %1957 = vst [vmem:[#allocation2 + $0x30] sm:$0xff] %v1941
        %1958 = vst [vmem:[#allocation2 + $0x38] sm:$0xff] %v1942
        %1959 = vst [vmem:[#allocation2 + $0x40] sm:$0xff] %v1943
        %1960 = vst [vmem:[#allocation2 + $0x48] sm:$0xff] %v1944
        %1961 = vst [vmem:[#allocation2 + $0x50] sm:$0xff] %v1945
        %1962 = vst [vmem:[#allocation2 + $0x58] sm:$0xff] %v1946
        %1963 = vst [vmem:[#allocation2 + $0x60] sm:$0xff] %v1947
        %1964 = vst [vmem:[#allocation2 + $0x68] sm:$0xff] %v1948
        %1965 = vst [vmem:[#allocation2 + $0x70] sm:$0xff] %v1949
        %1966 = vst [vmem:[#allocation2 + $0x78] sm:$0xff] %v1950
        // Predicated region
        $region49: #{rezero_feedforward.1} parent=43 // pred_check
          %p1967 = pneg %p330
        $region50: #{rezero_feedforward.1} parent=43 // pred_check_branch
          %1969 = sbr.rel (%p1967) target = $region52
        $region51: #{rezero_feedforward.1} parent=43 // pred_region
          %v1970 = vld [vmem:[#allocation2] sm:$0xff]
          %v1971 = vld [vmem:[#allocation2 + $0x8] sm:$0xff]
          %v1972 = vld [vmem:[#allocation2 + $0x10] sm:$0xff]
          %v1973 = vld [vmem:[#allocation2 + $0x18] sm:$0xff]
          %v1974 = vld [vmem:[#allocation2 + $0x20] sm:$0xff]
          %v1975 = vld [vmem:[#allocation2 + $0x28] sm:$0xff]
          %v1976 = vld [vmem:[#allocation2 + $0x30] sm:$0xff]
          %v1977 = vld [vmem:[#allocation2 + $0x38] sm:$0xff]
          %v1978 = vld [vmem:[#allocation2 + $0x40] sm:$0xff]
          %v1979 = vld [vmem:[#allocation2 + $0x48] sm:$0xff]
          %v1980 = vld [vmem:[#allocation2 + $0x50] sm:$0xff]
          %v1981 = vld [vmem:[#allocation2 + $0x58] sm:$0xff]
          %v1982 = vld [vmem:[#allocation2 + $0x60] sm:$0xff]
          %v1983 = vld [vmem:[#allocation2 + $0x68] sm:$0xff]
          %v1984 = vld [vmem:[#allocation2 + $0x70] sm:$0xff]
          %v1985 = vld [vmem:[#allocation2 + $0x78] sm:$0xff]
          %s1986 = sld [smem:[#allocation3]]
          %v1987 = vstv %s1986
          %v1988 = vmul.f32 %v1970, %v1987
          %v1989 = vmul.f32 %v1971, %v1987
          %v1990 = vmul.f32 %v1972, %v1987
          %v1991 = vmul.f32 %v1973, %v1987
          %v1992 = vmul.f32 %v1974, %v1987
          %v1993 = vmul.f32 %v1975, %v1987
          %v1994 = vmul.f32 %v1976, %v1987
          %v1995 = vmul.f32 %v1977, %v1987
          %v1996 = vmul.f32 %v1978, %v1987
          %v1997 = vmul.f32 %v1979, %v1987
          %v1998 = vmul.f32 %v1980, %v1987
          %v1999 = vmul.f32 %v1981, %v1987
          %v2000 = vmul.f32 %v1982, %v1987
          %v2001 = vmul.f32 %v1983, %v1987
          %v2002 = vmul.f32 %v1984, %v1987
          %v2003 = vmul.f32 %v1985, %v1987
          %2004 = vst [vmem:[%s304] sm:$0xff] %v1988
          %2005 = vst [vmem:[%s304 + $0x8] sm:$0xff] %v1989
          %2006 = vst [vmem:[%s304 + $0x10] sm:$0xff] %v1990
          %2007 = vst [vmem:[%s304 + $0x18] sm:$0xff] %v1991
          %2008 = vst [vmem:[%s304 + $0x20] sm:$0xff] %v1992
          %2009 = vst [vmem:[%s304 + $0x28] sm:$0xff] %v1993
          %2010 = vst [vmem:[%s304 + $0x30] sm:$0xff] %v1994
          %2011 = vst [vmem:[%s304 + $0x38] sm:$0xff] %v1995
          %2012 = vst [vmem:[%s304 + $0x40] sm:$0xff] %v1996
          %2013 = vst [vmem:[%s304 + $0x48] sm:$0xff] %v1997
          %2014 = vst [vmem:[%s304 + $0x50] sm:$0xff] %v1998
          %2015 = vst [vmem:[%s304 + $0x58] sm:$0xff] %v1999
          %2016 = vst [vmem:[%s304 + $0x60] sm:$0xff] %v2000
          %2017 = vst [vmem:[%s304 + $0x68] sm:$0xff] %v2001
          %2018 = vst [vmem:[%s304 + $0x70] sm:$0xff] %v2002
          %2019 = vst [vmem:[%s304 + $0x78] sm:$0xff] %v2003
        $region52: #{rezero_feedforward.1} parent=43 // pred_fallthru
          _
        %s2020 = sand.u32 %s187, 1
        %s2021 = scalar_lea.sflag [#allocation5], %s2020
        %s2022 = sand.u32 %s187, 1
        %s2023 = smul.addr %s2022, 128
        %s2024 = scalar_lea.vmem [#allocation4], %s2023
        // Predicated region
        $region53: #{rezero_feedforward.1} parent=43 // pred_check
          %p2025 = pneg %p197
        $region54: #{rezero_feedforward.1} parent=43 // pred_check_branch
          %2027 = sbr.rel (%p2025) target = $region56
        $region55: #{rezero_feedforward.1} parent=43 // pred_region
          %s2028 = smul.u32 16, %s25
          %s2030 = ssub.s32 2048, 2048
          %2031 = vsyncadd %s2021, %s2030
          %s2032 = smul.addr %s2028, 128
          %s2033 = scalar_lea.hbm %s6, %s2032
          %s2034 = sshll.u32 %s2024, 4
          %s2035 = int_to_ptr.vmem [resolvable:$true] %s2034
          %2040 = dma.vmem_to_hbm [thread:$0]  %s2035, 2048, %s2033, %s2021, 128, 128, 8
        $region56: #{rezero_feedforward.1} parent=43 // pred_fallthru
          _
      $region44: #{rezero_feedforward.1} parent=5 // pred_fallthru
        _
      %p2041 = scmp.le.s32.totalorder 2, %s16
      // Predicated region
      $region57: #{rezero_feedforward.1} parent=5 // pred_check
        %p2042 = pneg %p2041
      $region58: #{rezero_feedforward.1} parent=5 // pred_check_branch
        %2044 = sbr.rel (%p2042) target = $region60
      $region59: #{rezero_feedforward.1} parent=5 // pred_region
        %s2045 = ssub.s32 %s16, 2
        // Predicated region
        $region61: #{rezero_feedforward.1} parent=59 // pred_check
          %p2046 = pneg %p203
        $region62: #{rezero_feedforward.1} parent=59 // pred_check_branch
          %2048 = sbr.rel (%p2046) target = $region64
        $region63: #{rezero_feedforward.1} parent=59 // pred_region
          %s2049 = sand.u32 %s188, 1
          %s2050 = scalar_lea.sflag [#allocation5], %s2049
          %s2051 = sand.u32 %s188, 1
          %s2052 = smul.addr %s2051, 128
          %s2053 = scalar_lea.vmem [#allocation4], %s2052
          %2054 = dma.done %s2050, 2048
        $region64: #{rezero_feedforward.1} parent=59 // pred_fallthru
          _
      $region60: #{rezero_feedforward.1} parent=5 // pred_fallthru
        _
    $region6: #{rezero_feedforward.1} parent=1 // loop_footer
      %s20 = sadd.s32 1, %s16
    $region7: #{rezero_feedforward.1} parent=1 // loop_footer_branch
      %15 = sbr.rel target = $region3
    $region8: #{rezero_feedforward.1} parent=1 // loop_exit
      _
    %2055 = vsyncpa [#allocation5], 1
    %s2056 = scalar_lea.sflag [#allocation5], 1
    %2057 = vsyncpa %s2056, 1

</llo_original>
